<compile_context>
chip_gen: v5e
topology: v5e:2x2
jax: 0.10.0
libtpu: 0.0.40
codegen_flags: <defaults>
</compile_context>

<pallas_src>
import jax
import jax.numpy as jnp
from jax.experimental import pallas as pl
from jax.experimental.pallas import tpu as pltpu

# ----- logical model dims (from Net.__init__) -------------------------------
IN_FEATURES = 8                       # X_train.shape[1] -- small synthetic choice
HIDDEN = (400, 300, 100, 100)
OUT = 1

LANE = 128
PACK = 16          # bf16 packs 16 rows per sublane vreg -> round batch to 16


def _round_up(x, m):
    return ((x + m - 1) // m) * m


# ----- padded (TPU-friendly) dims --------------------------------------------
IN_P = _round_up(IN_FEATURES, PACK)                  # 16
H_P = tuple(_round_up(h, LANE) for h in HIDDEN)      # 512, 384, 128, 128
OUT_P = _round_up(OUT, LANE)                         # 128
DIMS_P = [(IN_P, H_P[0]), (H_P[0], H_P[1]), (H_P[1], H_P[2]),
          (H_P[2], H_P[3]), (H_P[3], OUT_P)]


def mlp_kernel(x_ref,
               w1_ref, b1_ref,
               w2_ref, b2_ref,
               w3_ref, b3_ref,
               w4_ref, b4_ref,
               w5_ref, b5_ref,
               o_ref):
    """Fused 5-layer MLP for one batch tile.

    Matmul operands are bf16 (MXU fast path), accumulation is f32 via
    preferred_element_type, and the bias-add / ReLU epilogue stays in f32
    (v5e VPU has no bf16 path).
    """
    cdt = w1_ref.dtype                      # matmul-operand dtype (bf16)
    h = x_ref[...]
    # Hidden layers: dot -> +bias -> ReLU (f32) -> downcast for next MXU pass.
    for w_ref, b_ref in ((w1_ref, b1_ref), (w2_ref, b2_ref),
                         (w3_ref, b3_ref), (w4_ref, b4_ref)):
        h = jnp.maximum(
            jnp.dot(h, w_ref[...], preferred_element_type=jnp.float32)
            + b_ref[...],
            0.0).astype(cdt)
    # TODO(synk): v5e-only win: split the tile into 2 statically-unrolled
    # sub-tiles so each layer's vmatmul overlaps the other sub-tile's f32
    # epilogue (bias+ReLU+pack) -- neutral on v6e/v7x.
    o_ref[...] = (
        jnp.dot(h, w5_ref[...], preferred_element_type=jnp.float32)
        + b5_ref[...]
    ).astype(o_ref.dtype)


def prepare_params(params, compute_dtype=jnp.bfloat16):
    """Zero-pad + cast weights/biases ONCE (hoisted out of the per-call path).

    Accepts (in, out) weights and 1-D or (1, out) biases.  Weights go to the
    compute dtype (bf16), biases stay f32 for the f32 epilogue.
    """
    # TODO(synk): optional fp8 (v7x) / int8 (v5e/v6e) weight path for the
    # latency-bound small-batch regime (fold a per-tensor scale into the bias).
    flat = []
    for (w, b), (ki, ko) in zip(params, DIMS_P):
        w = jnp.asarray(w)
        b = jnp.asarray(b).reshape(1, -1)
        w_p = jnp.zeros((ki, ko), compute_dtype).at[:w.shape[0], :w.shape[1]].set(
            w.astype(compute_dtype))
        b_p = jnp.zeros((1, ko), jnp.float32).at[:, :b.shape[1]].set(
            b.astype(jnp.float32))
        flat += [w_p, b_p]
    return tuple(flat)


def net_forward(x, flat_params, *, tile_b=None):
    """Pallas wrapper.

    - Batch is zero-padded to a multiple of tile_b (multiple of 16 for bf16
      sublane packing); features are padded per DIMS_P above.
    - Heuristic: single grid step for tiny batches; >=2 "parallel" grid steps
      whenever B > 32 so v7x megacore can shard across both TensorCores;
      1024-row tiles for large batches to amortize the ~0.35 us/step overhead
      while staying well inside every generation's VMEM default.
    - Weight/bias blocks have constant index_maps (VMEM-resident) and are
      requested single-buffered (pl.Buffered(1)) to drop the redundant buffer.
    """
    B, F = x.shape
    assert F == IN_FEATURES
    compute_dtype = flat_params[0].dtype

    if tile_b is None:
        if B <= 2 * PACK:
            tile_b = _round_up(B, PACK)               # single grid step
        elif B <= 2048:
            tile_b = _round_up((B + 1) // 2, PACK)    # 2 steps -> both v7x TCs busy
        else:
            tile_b = 1024                             # amortize per-step overhead
    B_pad = _round_up(B, tile_b)
    grid = (B_pad // tile_b,)

    # Only the batch dim and the tiny (8->16) K dim get padded here; the
    # expensive per-call weight pad/cast lives in prepare_params().
    x_p = jnp.zeros((B_pad, IN_P), compute_dtype).at[:B, :F].set(
        x.astype(compute_dtype))

    flops = 2 * B_pad * sum(ki * ko for ki, ko in DIMS_P)
    bytes_accessed = (x_p.size * x_p.dtype.itemsize
                      + sum(a.size * a.dtype.itemsize for a in flat_params)
                      + B_pad * OUT_P * jnp.dtype(compute_dtype).itemsize)
    cost = pl.CostEstimate(flops=flops, transcendentals=0,
                           bytes_accessed=bytes_accessed)

    def param_spec(shape, single_buffer):
        # Whole (small) parameter array as one block, same block every step.
        if single_buffer and hasattr(pl, "Buffered"):
            try:
                return pl.BlockSpec(shape, lambda i: (0, 0),
                                    pipeline_mode=pl.Buffered(1))
            except TypeError:
                pass
        return pl.BlockSpec(shape, lambda i: (0, 0))

    def run(single_buffer):
        in_specs = [pl.BlockSpec((tile_b, IN_P), lambda i: (i, 0))]
        in_specs += [param_spec(a.shape, single_buffer) for a in flat_params]
        out_spec = pl.BlockSpec((tile_b, OUT_P), lambda i: (i, 0))
        return pl.pallas_call(
            mlp_kernel,
            out_shape=jax.ShapeDtypeStruct((B_pad, OUT_P), compute_dtype),
            grid_spec=pltpu.PrefetchScalarGridSpec(
                num_scalar_prefetch=0,
                grid=grid,
                in_specs=in_specs,
                out_specs=out_spec,
            ),
            compiler_params=pltpu.CompilerParams(
                dimension_semantics=("parallel",)),
            cost_estimate=cost,
        )(x_p, *flat_params)

    try:
        out_padded = run(single_buffer=True)
    except Exception:
        # Fallback if this JAX build rejects pipeline_mode / Buffered(1).
        out_padded = run(single_buffer=False)

    # TODO(synk): for tile_b >= 1024, lane-pack column 0 into a
    # (tile_b // 128, 128) block inside the kernel (one XLU transpose per tile)
    # to cut the output write-back another ~64x while keeping unmasked stores.
    return out_padded[:B, :OUT].astype(jnp.float32)


def init_params(key):
    """Deterministic init mimicking nn.Linear default (uniform +/- 1/sqrt(fan_in)).
    Weights stored as (in, out); biases as (1, out)."""
    dims = [(IN_FEATURES, HIDDEN[0]), (HIDDEN[0], HIDDEN[1]),
            (HIDDEN[1], HIDDEN[2]), (HIDDEN[2], HIDDEN[3]), (HIDDEN[3], OUT)]
    params = []
    for fan_in, fan_out in dims:
        key, kw, kb = jax.random.split(key, 3)
        bound = 1.0 / jnp.sqrt(float(fan_in))
        w = jax.random.uniform(kw, (fan_in, fan_out), jnp.float32, -bound, bound)
        b = jax.random.uniform(kb, (1, fan_out), jnp.float32, -bound, bound)
        params.append((w, b))
    return params


def reference_forward(x, params):
    h = x
    for i, (w, b) in enumerate(params):
        h = h @ w + b
        if i < len(params) - 1:
            h = jnp.maximum(h, 0.0)
    return h


if __name__ == "__main__":
    key = jax.random.PRNGKey(0)
    k_params, k_x = jax.random.split(key)
    params = init_params(k_params)
    flat = prepare_params(params)      # pad + cast once, not per forward call

    B = 16
    x = jax.random.normal(k_x, (B, IN_FEATURES), jnp.float32)

    out = net_forward(x, flat)
    out = jax.block_until_ready(out)

    ref = reference_forward(x, params)   # pure-f32 reference
    assert out.shape == (B, OUT)
    # bf16 matmul operands + bf16 output store (f32 accumulation) tolerance.
    assert jnp.allclose(out, ref, atol=5e-2, rtol=5e-2)

    print("KERNEL_OK")
</pallas_src>

<mosaic_0001>
module attributes {stable_mosaic.version = 11 : i64} {
  func.func @mlp_kernel(%arg0: i32, %arg1: memref<16x16xbf16, #tpu.memory_space<vmem>>, %arg2: memref<16x512xbf16, #tpu.memory_space<vmem>>, %arg3: memref<1x512xf32, #tpu.memory_space<vmem>>, %arg4: memref<512x384xbf16, #tpu.memory_space<vmem>>, %arg5: memref<1x384xf32, #tpu.memory_space<vmem>>, %arg6: memref<384x128xbf16, #tpu.memory_space<vmem>>, %arg7: memref<1x128xf32, #tpu.memory_space<vmem>>, %arg8: memref<128x128xbf16, #tpu.memory_space<vmem>>, %arg9: memref<1x128xf32, #tpu.memory_space<vmem>>, %arg10: memref<128x128xbf16, #tpu.memory_space<vmem>>, %arg11: memref<1x128xf32, #tpu.memory_space<vmem>>, %arg12: memref<16x128xbf16, #tpu.memory_space<vmem>>) attributes {dimension_semantics = [#tpu.dimension_semantics<parallel>], iteration_bounds = array<i64: 1>, scalar_prefetch = 0 : i64, scratch_operands = 0 : i64, tpu.core_type = #tpu.core_type<tc>, window_params = [{transform_indices = @transform_0, window_bounds = array<i64: 16, 16>}, {pipeline_mode = #tpu.pipeline_mode<synchronous>, transform_indices = @transform_1, window_bounds = array<i64: 16, 512>}, {pipeline_mode = #tpu.pipeline_mode<synchronous>, transform_indices = @transform_2, window_bounds = array<i64: 1, 512>}, {pipeline_mode = #tpu.pipeline_mode<synchronous>, transform_indices = @transform_3, window_bounds = array<i64: 512, 384>}, {pipeline_mode = #tpu.pipeline_mode<synchronous>, transform_indices = @transform_4, window_bounds = array<i64: 1, 384>}, {pipeline_mode = #tpu.pipeline_mode<synchronous>, transform_indices = @transform_5, window_bounds = array<i64: 384, 128>}, {pipeline_mode = #tpu.pipeline_mode<synchronous>, transform_indices = @transform_6, window_bounds = array<i64: 1, 128>}, {pipeline_mode = #tpu.pipeline_mode<synchronous>, transform_indices = @transform_7, window_bounds = array<i64: 128, 128>}, {pipeline_mode = #tpu.pipeline_mode<synchronous>, transform_indices = @transform_8, window_bounds = array<i64: 1, 128>}, {pipeline_mode = #tpu.pipeline_mode<synchronous>, transform_indices = @transform_9, window_bounds = array<i64: 128, 128>}, {pipeline_mode = #tpu.pipeline_mode<synchronous>, transform_indices = @transform_10, window_bounds = array<i64: 1, 128>}, {transform_indices = @transform_11, window_bounds = array<i64: 16, 128>}]} {
    %c0 = arith.constant 0 : index
    %c0_0 = arith.constant 0 : index
    %0 = vector.load %arg1[%c0, %c0_0] : memref<16x16xbf16, #tpu.memory_space<vmem>>, vector<16x16xbf16>
    %c0_1 = arith.constant 0 : index
    %c0_2 = arith.constant 0 : index
    %1 = vector.load %arg2[%c0_1, %c0_2] : memref<16x512xbf16, #tpu.memory_space<vmem>>, vector<16x512xbf16>
    %cst = arith.constant dense<0.000000e+00> : vector<16x512xf32>
    %2 = tpu.matmul %0, %1, %cst {dimension_numbers = #tpu.dot_dimension_numbers<[1], [0], [0], [1], [0, 0, 1, 1], [], []>} : vector<16x16xbf16>, vector<16x512xbf16>, vector<16x512xf32> -> vector<16x512xf32>
    %c0_3 = arith.constant 0 : index
    %c0_4 = arith.constant 0 : index
    %3 = vector.load %arg3[%c0_3, %c0_4] : memref<1x512xf32, #tpu.memory_space<vmem>>, vector<1x512xf32>
    %4 = vector.broadcast %3 : vector<1x512xf32> to vector<16x512xf32>
    %5 = arith.addf %2, %4 : vector<16x512xf32>
    %cst_5 = arith.constant 0.000000e+00 : f32
    %6 = vector.broadcast %cst_5 : f32 to vector<16x512xf32>
    %7 = arith.maximumf %5, %6 : vector<16x512xf32>
    %8 = arith.truncf %7 : vector<16x512xf32> to vector<16x512xbf16>
    %c0_6 = arith.constant 0 : index
    %c0_7 = arith.constant 0 : index
    %9 = vector.load %arg4[%c0_6, %c0_7] : memref<512x384xbf16, #tpu.memory_space<vmem>>, vector<512x384xbf16>
    %cst_8 = arith.constant dense<0.000000e+00> : vector<16x384xf32>
    %10 = tpu.matmul %8, %9, %cst_8 {dimension_numbers = #tpu.dot_dimension_numbers<[1], [0], [0], [1], [0, 0, 1, 1], [], []>} : vector<16x512xbf16>, vector<512x384xbf16>, vector<16x384xf32> -> vector<16x384xf32>
    %c0_9 = arith.constant 0 : index
    %c0_10 = arith.constant 0 : index
    %11 = vector.load %arg5[%c0_9, %c0_10] : memref<1x384xf32, #tpu.memory_space<vmem>>, vector<1x384xf32>
    %12 = vector.broadcast %11 : vector<1x384xf32> to vector<16x384xf32>
    %13 = arith.addf %10, %12 : vector<16x384xf32>
    %cst_11 = arith.constant 0.000000e+00 : f32
    %14 = vector.broadcast %cst_11 : f32 to vector<16x384xf32>
    %15 = arith.maximumf %13, %14 : vector<16x384xf32>
    %16 = arith.truncf %15 : vector<16x384xf32> to vector<16x384xbf16>
    %c0_12 = arith.constant 0 : index
    %c0_13 = arith.constant 0 : index
    %17 = vector.load %arg6[%c0_12, %c0_13] : memref<384x128xbf16, #tpu.memory_space<vmem>>, vector<384x128xbf16>
    %cst_14 = arith.constant dense<0.000000e+00> : vector<16x128xf32>
    %18 = tpu.matmul %16, %17, %cst_14 {dimension_numbers = #tpu.dot_dimension_numbers<[1], [0], [0], [1], [0, 0, 1, 1], [], []>} : vector<16x384xbf16>, vector<384x128xbf16>, vector<16x128xf32> -> vector<16x128xf32>
    %c0_15 = arith.constant 0 : index
    %c0_16 = arith.constant 0 : index
    %19 = vector.load %arg7[%c0_15, %c0_16] : memref<1x128xf32, #tpu.memory_space<vmem>>, vector<1x128xf32>
    %20 = vector.broadcast %19 : vector<1x128xf32> to vector<16x128xf32>
    %21 = arith.addf %18, %20 : vector<16x128xf32>
    %cst_17 = arith.constant 0.000000e+00 : f32
    %22 = vector.broadcast %cst_17 : f32 to vector<16x128xf32>
    %23 = arith.maximumf %21, %22 : vector<16x128xf32>
    %24 = arith.truncf %23 : vector<16x128xf32> to vector<16x128xbf16>
    %c0_18 = arith.constant 0 : index
    %c0_19 = arith.constant 0 : index
    %25 = vector.load %arg8[%c0_18, %c0_19] : memref<128x128xbf16, #tpu.memory_space<vmem>>, vector<128x128xbf16>
    %cst_20 = arith.constant dense<0.000000e+00> : vector<16x128xf32>
    %26 = tpu.matmul %24, %25, %cst_20 {dimension_numbers = #tpu.dot_dimension_numbers<[1], [0], [0], [1], [0, 0, 1, 1], [], []>} : vector<16x128xbf16>, vector<128x128xbf16>, vector<16x128xf32> -> vector<16x128xf32>
    %c0_21 = arith.constant 0 : index
    %c0_22 = arith.constant 0 : index
    %27 = vector.load %arg9[%c0_21, %c0_22] : memref<1x128xf32, #tpu.memory_space<vmem>>, vector<1x128xf32>
    %28 = vector.broadcast %27 : vector<1x128xf32> to vector<16x128xf32>
    %29 = arith.addf %26, %28 : vector<16x128xf32>
    %cst_23 = arith.constant 0.000000e+00 : f32
    %30 = vector.broadcast %cst_23 : f32 to vector<16x128xf32>
    %31 = arith.maximumf %29, %30 : vector<16x128xf32>
    %32 = arith.truncf %31 : vector<16x128xf32> to vector<16x128xbf16>
    %c0_24 = arith.constant 0 : index
    %c0_25 = arith.constant 0 : index
    %33 = vector.load %arg10[%c0_24, %c0_25] : memref<128x128xbf16, #tpu.memory_space<vmem>>, vector<128x128xbf16>
    %cst_26 = arith.constant dense<0.000000e+00> : vector<16x128xf32>
    %34 = tpu.matmul %32, %33, %cst_26 {dimension_numbers = #tpu.dot_dimension_numbers<[1], [0], [0], [1], [0, 0, 1, 1], [], []>} : vector<16x128xbf16>, vector<128x128xbf16>, vector<16x128xf32> -> vector<16x128xf32>
    %c0_27 = arith.constant 0 : index
    %c0_28 = arith.constant 0 : index
    %35 = vector.load %arg11[%c0_27, %c0_28] : memref<1x128xf32, #tpu.memory_space<vmem>>, vector<1x128xf32>
    %36 = vector.broadcast %35 : vector<1x128xf32> to vector<16x128xf32>
    %37 = arith.addf %34, %36 : vector<16x128xf32>
    %38 = arith.truncf %37 : vector<16x128xf32> to vector<16x128xbf16>
    %c0_29 = arith.constant 0 : index
    %c0_30 = arith.constant 0 : index
    %39 = vector.load %arg12[%c0_29, %c0_30] : memref<16x128xbf16, #tpu.memory_space<vmem>>, vector<16x128xbf16>
    tpu.vector_store %arg12[%c0_29, %c0_30], %38 {strides = array<i32>} : memref<16x128xbf16, #tpu.memory_space<vmem>>, vector<16x128xbf16>,
    return
  }
  func.func @transform_0(%arg0: i32) -> (i32, i32) {
    %c0_i32 = arith.constant 0 : i32
    %c0_i32_0 = arith.constant 0 : i32
    return %arg0, %c0_i32 : i32, i32
  }
  func.func @transform_1(%arg0: i32) -> (i32, i32) {
    %c0_i32 = arith.constant 0 : i32
    %c0_i32_0 = arith.constant 0 : i32
    %c0_i32_1 = arith.constant 0 : i32
    return %c0_i32, %c0_i32_0 : i32, i32
  }
  func.func @transform_2(%arg0: i32) -> (i32, i32) {
    %c0_i32 = arith.constant 0 : i32
    %c0_i32_0 = arith.constant 0 : i32
    %c0_i32_1 = arith.constant 0 : i32
    return %c0_i32, %c0_i32_0 : i32, i32
  }
  func.func @transform_3(%arg0: i32) -> (i32, i32) {
    %c0_i32 = arith.constant 0 : i32
    %c0_i32_0 = arith.constant 0 : i32
    %c0_i32_1 = arith.constant 0 : i32
    return %c0_i32, %c0_i32_0 : i32, i32
  }
  func.func @transform_4(%arg0: i32) -> (i32, i32) {
    %c0_i32 = arith.constant 0 : i32
    %c0_i32_0 = arith.constant 0 : i32
    %c0_i32_1 = arith.constant 0 : i32
    return %c0_i32, %c0_i32_0 : i32, i32
  }
  func.func @transform_5(%arg0: i32) -> (i32, i32) {
    %c0_i32 = arith.constant 0 : i32
    %c0_i32_0 = arith.constant 0 : i32
    %c0_i32_1 = arith.constant 0 : i32
    return %c0_i32, %c0_i32_0 : i32, i32
  }
  func.func @transform_6(%arg0: i32) -> (i32, i32) {
    %c0_i32 = arith.constant 0 : i32
    %c0_i32_0 = arith.constant 0 : i32
    %c0_i32_1 = arith.constant 0 : i32
    return %c0_i32, %c0_i32_0 : i32, i32
  }
  func.func @transform_7(%arg0: i32) -> (i32, i32) {
    %c0_i32 = arith.constant 0 : i32
    %c0_i32_0 = arith.constant 0 : i32
    %c0_i32_1 = arith.constant 0 : i32
    return %c0_i32, %c0_i32_0 : i32, i32
  }
  func.func @transform_8(%arg0: i32) -> (i32, i32) {
    %c0_i32 = arith.constant 0 : i32
    %c0_i32_0 = arith.constant 0 : i32
    %c0_i32_1 = arith.constant 0 : i32
    return %c0_i32, %c0_i32_0 : i32, i32
  }
  func.func @transform_9(%arg0: i32) -> (i32, i32) {
    %c0_i32 = arith.constant 0 : i32
    %c0_i32_0 = arith.constant 0 : i32
    %c0_i32_1 = arith.constant 0 : i32
    return %c0_i32, %c0_i32_0 : i32, i32
  }
  func.func @transform_10(%arg0: i32) -> (i32, i32) {
    %c0_i32 = arith.constant 0 : i32
    %c0_i32_0 = arith.constant 0 : i32
    %c0_i32_1 = arith.constant 0 : i32
    return %c0_i32, %c0_i32_0 : i32, i32
  }
  func.func @transform_11(%arg0: i32) -> (i32, i32) {
    %c0_i32 = arith.constant 0 : i32
    %c0_i32_0 = arith.constant 0 : i32
    return %arg0, %c0_i32 : i32, i32
  }
}

module attributes {stable_mosaic.version = 11 : i64} {
  func.func @mlp_kernel(%arg0: i32, %arg1: memref<16x16xbf16, #tpu.memory_space<vmem>>, %arg2: memref<16x512xbf16, #tpu.memory_space<vmem>>, %arg3: memref<1x512xf32, #tpu.memory_space<vmem>>, %arg4: memref<512x384xbf16, #tpu.memory_space<vmem>>, %arg5: memref<1x384xf32, #tpu.memory_space<vmem>>, %arg6: memref<384x128xbf16, #tpu.memory_space<vmem>>, %arg7: memref<1x128xf32, #tpu.memory_space<vmem>>, %arg8: memref<128x128xbf16, #tpu.memory_space<vmem>>, %arg9: memref<1x128xf32, #tpu.memory_space<vmem>>, %arg10: memref<128x128xbf16, #tpu.memory_space<vmem>>, %arg11: memref<1x128xf32, #tpu.memory_space<vmem>>, %arg12: memref<16x128xbf16, #tpu.memory_space<vmem>>) attributes {dimension_semantics = [#tpu.dimension_semantics<parallel>], iteration_bounds = array<i64: 1>, scalar_prefetch = 0 : i64, scratch_operands = 0 : i64, tpu.core_type = #tpu.core_type<tc>, window_params = [{transform_indices = @transform_0, window_bounds = array<i64: 16, 16>}, {pipeline_mode = #tpu.pipeline_mode<synchronous>, transform_indices = @transform_1, window_bounds = array<i64: 16, 512>}, {pipeline_mode = #tpu.pipeline_mode<synchronous>, transform_indices = @transform_2, window_bounds = array<i64: 1, 512>}, {pipeline_mode = #tpu.pipeline_mode<synchronous>, transform_indices = @transform_3, window_bounds = array<i64: 512, 384>}, {pipeline_mode = #tpu.pipeline_mode<synchronous>, transform_indices = @transform_4, window_bounds = array<i64: 1, 384>}, {pipeline_mode = #tpu.pipeline_mode<synchronous>, transform_indices = @transform_5, window_bounds = array<i64: 384, 128>}, {pipeline_mode = #tpu.pipeline_mode<synchronous>, transform_indices = @transform_6, window_bounds = array<i64: 1, 128>}, {pipeline_mode = #tpu.pipeline_mode<synchronous>, transform_indices = @transform_7, window_bounds = array<i64: 128, 128>}, {pipeline_mode = #tpu.pipeline_mode<synchronous>, transform_indices = @transform_8, window_bounds = array<i64: 1, 128>}, {pipeline_mode = #tpu.pipeline_mode<synchronous>, transform_indices = @transform_9, window_bounds = array<i64: 128, 128>}, {pipeline_mode = #tpu.pipeline_mode<synchronous>, transform_indices = @transform_10, window_bounds = array<i64: 1, 128>}, {transform_indices = @transform_11, window_bounds = array<i64: 16, 128>}]} {
    %c0 = arith.constant 0 : index
    %c0_0 = arith.constant 0 : index
    %0 = vector.load %arg1[%c0, %c0_0] : memref<16x16xbf16, #tpu.memory_space<vmem>>, vector<16x16xbf16>
    %c0_1 = arith.constant 0 : index
    %c0_2 = arith.constant 0 : index
    %1 = vector.load %arg2[%c0_1, %c0_2] : memref<16x512xbf16, #tpu.memory_space<vmem>>, vector<16x512xbf16>
    %cst = arith.constant dense<0.000000e+00> : vector<16x512xf32>
    %2 = tpu.matmul %0, %1, %cst {dimension_numbers = #tpu.dot_dimension_numbers<[1], [0], [0], [1], [0, 0, 1, 1], [], []>} : vector<16x16xbf16>, vector<16x512xbf16>, vector<16x512xf32> -> vector<16x512xf32>
    %c0_3 = arith.constant 0 : index
    %c0_4 = arith.constant 0 : index
    %3 = vector.load %arg3[%c0_3, %c0_4] : memref<1x512xf32, #tpu.memory_space<vmem>>, vector<1x512xf32>
    %4 = vector.broadcast %3 : vector<1x512xf32> to vector<16x512xf32>
    %5 = arith.addf %2, %4 : vector<16x512xf32>
    %cst_5 = arith.constant 0.000000e+00 : f32
    %6 = vector.broadcast %cst_5 : f32 to vector<16x512xf32>
    %7 = arith.maximumf %5, %6 : vector<16x512xf32>
    %8 = arith.truncf %7 : vector<16x512xf32> to vector<16x512xbf16>
    %c0_6 = arith.constant 0 : index
    %c0_7 = arith.constant 0 : index
    %9 = vector.load %arg4[%c0_6, %c0_7] : memref<512x384xbf16, #tpu.memory_space<vmem>>, vector<512x384xbf16>
    %cst_8 = arith.constant dense<0.000000e+00> : vector<16x384xf32>
    %10 = tpu.matmul %8, %9, %cst_8 {dimension_numbers = #tpu.dot_dimension_numbers<[1], [0], [0], [1], [0, 0, 1, 1], [], []>} : vector<16x512xbf16>, vector<512x384xbf16>, vector<16x384xf32> -> vector<16x384xf32>
    %c0_9 = arith.constant 0 : index
    %c0_10 = arith.constant 0 : index
    %11 = vector.load %arg5[%c0_9, %c0_10] : memref<1x384xf32, #tpu.memory_space<vmem>>, vector<1x384xf32>
    %12 = vector.broadcast %11 : vector<1x384xf32> to vector<16x384xf32>
    %13 = arith.addf %10, %12 : vector<16x384xf32>
    %cst_11 = arith.constant 0.000000e+00 : f32
    %14 = vector.broadcast %cst_11 : f32 to vector<16x384xf32>
    %15 = arith.maximumf %13, %14 : vector<16x384xf32>
    %16 = arith.truncf %15 : vector<16x384xf32> to vector<16x384xbf16>
    %c0_12 = arith.constant 0 : index
    %c0_13 = arith.constant 0 : index
    %17 = vector.load %arg6[%c0_12, %c0_13] : memref<384x128xbf16, #tpu.memory_space<vmem>>, vector<384x128xbf16>
    %cst_14 = arith.constant dense<0.000000e+00> : vector<16x128xf32>
    %18 = tpu.matmul %16, %17, %cst_14 {dimension_numbers = #tpu.dot_dimension_numbers<[1], [0], [0], [1], [0, 0, 1, 1], [], []>} : vector<16x384xbf16>, vector<384x128xbf16>, vector<16x128xf32> -> vector<16x128xf32>
    %c0_15 = arith.constant 0 : index
    %c0_16 = arith.constant 0 : index
    %19 = vector.load %arg7[%c0_15, %c0_16] : memref<1x128xf32, #tpu.memory_space<vmem>>, vector<1x128xf32>
    %20 = vector.broadcast %19 : vector<1x128xf32> to vector<16x128xf32>
    %21 = arith.addf %18, %20 : vector<16x128xf32>
    %cst_17 = arith.constant 0.000000e+00 : f32
    %22 = vector.broadcast %cst_17 : f32 to vector<16x128xf32>
    %23 = arith.maximumf %21, %22 : vector<16x128xf32>
    %24 = arith.truncf %23 : vector<16x128xf32> to vector<16x128xbf16>
    %c0_18 = arith.constant 0 : index
    %c0_19 = arith.constant 0 : index
    %25 = vector.load %arg8[%c0_18, %c0_19] : memref<128x128xbf16, #tpu.memory_space<vmem>>, vector<128x128xbf16>
    %cst_20 = arith.constant dense<0.000000e+00> : vector<16x128xf32>
    %26 = tpu.matmul %24, %25, %cst_20 {dimension_numbers = #tpu.dot_dimension_numbers<[1], [0], [0], [1], [0, 0, 1, 1], [], []>} : vector<16x128xbf16>, vector<128x128xbf16>, vector<16x128xf32> -> vector<16x128xf32>
    %c0_21 = arith.constant 0 : index
    %c0_22 = arith.constant 0 : index
    %27 = vector.load %arg9[%c0_21, %c0_22] : memref<1x128xf32, #tpu.memory_space<vmem>>, vector<1x128xf32>
    %28 = vector.broadcast %27 : vector<1x128xf32> to vector<16x128xf32>
    %29 = arith.addf %26, %28 : vector<16x128xf32>
    %cst_23 = arith.constant 0.000000e+00 : f32
    %30 = vector.broadcast %cst_23 : f32 to vector<16x128xf32>
    %31 = arith.maximumf %29, %30 : vector<16x128xf32>
    %32 = arith.truncf %31 : vector<16x128xf32> to vector<16x128xbf16>
    %c0_24 = arith.constant 0 : index
    %c0_25 = arith.constant 0 : index
    %33 = vector.load %arg10[%c0_24, %c0_25] : memref<128x128xbf16, #tpu.memory_space<vmem>>, vector<128x128xbf16>
    %cst_26 = arith.constant dense<0.000000e+00> : vector<16x128xf32>
    %34 = tpu.matmul %32, %33, %cst_26 {dimension_numbers = #tpu.dot_dimension_numbers<[1], [0], [0], [1], [0, 0, 1, 1], [], []>} : vector<16x128xbf16>, vector<128x128xbf16>, vector<16x128xf32> -> vector<16x128xf32>
    %c0_27 = arith.constant 0 : index
    %c0_28 = arith.constant 0 : index
    %35 = vector.load %arg11[%c0_27, %c0_28] : memref<1x128xf32, #tpu.memory_space<vmem>>, vector<1x128xf32>
    %36 = vector.broadcast %35 : vector<1x128xf32> to vector<16x128xf32>
    %37 = arith.addf %34, %36 : vector<16x128xf32>
    %38 = arith.truncf %37 : vector<16x128xf32> to vector<16x128xbf16>
    %c0_29 = arith.constant 0 : index
    %c0_30 = arith.constant 0 : index
    %39 = vector.load %arg12[%c0_29, %c0_30] : memref<16x128xbf16, #tpu.memory_space<vmem>>, vector<16x128xbf16>
    tpu.vector_store %arg12[%c0_29, %c0_30], %38 {strides = array<i32>} : memref<16x128xbf16, #tpu.memory_space<vmem>>, vector<16x128xbf16>,
    return
  }
  func.func @transform_0(%arg0: i32) -> (i32, i32) {
    %c0_i32 = arith.constant 0 : i32
    %c0_i32_0 = arith.constant 0 : i32
    return %arg0, %c0_i32 : i32, i32
  }
  func.func @transform_1(%arg0: i32) -> (i32, i32) {
    %c0_i32 = arith.constant 0 : i32
    %c0_i32_0 = arith.constant 0 : i32
    %c0_i32_1 = arith.constant 0 : i32
    return %c0_i32, %c0_i32_0 : i32, i32
  }
  func.func @transform_2(%arg0: i32) -> (i32, i32) {
    %c0_i32 = arith.constant 0 : i32
    %c0_i32_0 = arith.constant 0 : i32
    %c0_i32_1 = arith.constant 0 : i32
    return %c0_i32, %c0_i32_0 : i32, i32
  }
  func.func @transform_3(%arg0: i32) -> (i32, i32) {
    %c0_i32 = arith.constant 0 : i32
    %c0_i32_0 = arith.constant 0 : i32
    %c0_i32_1 = arith.constant 0 : i32
    return %c0_i32, %c0_i32_0 : i32, i32
  }
  func.func @transform_4(%arg0: i32) -> (i32, i32) {
    %c0_i32 = arith.constant 0 : i32
    %c0_i32_0 = arith.constant 0 : i32
    %c0_i32_1 = arith.constant 0 : i32
    return %c0_i32, %c0_i32_0 : i32, i32
  }
  func.func @transform_5(%arg0: i32) -> (i32, i32) {
    %c0_i32 = arith.constant 0 : i32
    %c0_i32_0 = arith.constant 0 : i32
    %c0_i32_1 = arith.constant 0 : i32
    return %c0_i32, %c0_i32_0 : i32, i32
  }
  func.func @transform_6(%arg0: i32) -> (i32, i32) {
    %c0_i32 = arith.constant 0 : i32
    %c0_i32_0 = arith.constant 0 : i32
    %c0_i32_1 = arith.constant 0 : i32
    return %c0_i32, %c0_i32_0 : i32, i32
  }
  func.func @transform_7(%arg0: i32) -> (i32, i32) {
    %c0_i32 = arith.constant 0 : i32
    %c0_i32_0 = arith.constant 0 : i32
    %c0_i32_1 = arith.constant 0 : i32
    return %c0_i32, %c0_i32_0 : i32, i32
  }
  func.func @transform_8(%arg0: i32) -> (i32, i32) {
    %c0_i32 = arith.constant 0 : i32
    %c0_i32_0 = arith.constant 0 : i32
    %c0_i32_1 = arith.constant 0 : i32
    return %c0_i32, %c0_i32_0 : i32, i32
  }
  func.func @transform_9(%arg0: i32) -> (i32, i32) {
    %c0_i32 = arith.constant 0 : i32
    %c0_i32_0 = arith.constant 0 : i32
    %c0_i32_1 = arith.constant 0 : i32
    return %c0_i32, %c0_i32_0 : i32, i32
  }
  func.func @transform_10(%arg0: i32) -> (i32, i32) {
    %c0_i32 = arith.constant 0 : i32
    %c0_i32_0 = arith.constant 0 : i32
    %c0_i32_1 = arith.constant 0 : i32
    return %c0_i32, %c0_i32_0 : i32, i32
  }
  func.func @transform_11(%arg0: i32) -> (i32, i32) {
    %c0_i32 = arith.constant 0 : i32
    %c0_i32_0 = arith.constant 0 : i32
    return %arg0, %c0_i32 : i32, i32
  }
}

</mosaic_0001>

<llo_original>
// kernel: tpu_custom_call.1
$region0: #{tpu_custom_call.1}
  #allocation0 [shape = 'u32[]', space=smem, size = 0x4, offset = 0x4, fixed_abs, tag = 'smem constant byte address 0x4 - core index']
  #allocation1 [shape = 'u32[72,128]{1,0:T(1,128)}', space=vmem, size = 0x9000, scoped, tag = 'internal scratch']
  %s0 = inlined_call_operand.hbm [shape: bf16[16,16], index: 0, kind: input, shape index: {}]
  %s1 = inlined_call_operand.hbm [shape: bf16[16,512], index: 1, kind: input, shape index: {}]
  %s2 = inlined_call_operand.hbm [shape: f32[1,512], index: 2, kind: input, shape index: {}]
  %s3 = inlined_call_operand.hbm [shape: bf16[512,384], index: 3, kind: input, shape index: {}]
  %s4 = inlined_call_operand.vmem [shape: f32[1,384], index: 4, kind: input, shape index: {}]
  %s5 = inlined_call_operand.hbm [shape: bf16[384,128], index: 5, kind: input, shape index: {}]
  %s6 = inlined_call_operand.vmem [shape: f32[1,128], index: 6, kind: input, shape index: {}]
  %s7 = inlined_call_operand.hbm [shape: bf16[128,128], index: 7, kind: input, shape index: {}]
  %s8 = inlined_call_operand.vmem [shape: f32[1,128], index: 8, kind: input, shape index: {}]
  %s9 = inlined_call_operand.hbm [shape: bf16[128,128], index: 9, kind: input, shape index: {}]
  %s10 = inlined_call_operand.vmem [shape: f32[1,128], index: 10, kind: input, shape index: {}]
  %s11 = inlined_call_operand.hbm [shape: bf16[16,128], index: 11, kind: output, shape index: {}]
  %s12 = sld [smem:[#allocation0]]
  $region82: #{tpu_custom_call.1} parent=0
    _
  %s14 = ssub.s32 1, %s12
  %s15 = scalar_select 0, %s14, %s12
  $region1: #{tpu_custom_call.1} parent=0
    #allocation2 [shape = 'u8[4096]{0}', space=vmem, size = 0x1000, scoped, tag = 'input window, operand 0, single buffered']
    #allocation3 [shape = 's32[1]{0}', space=sflag, size = 0x4, scoped, tag = 'scoped memory for tpu_custom_call.1']
    #allocation4 [shape = 's32[1]{0}', space=sflag, size = 0x4, scoped, tag = 'scoped memory for tpu_custom_call.1']
    #allocation5 [shape = 'u8[16384]{0}', space=vmem, size = 0x4000, scoped, tag = 'input window, operand 1, single buffered']
    #allocation6 [shape = 's32[1]{0}', space=sflag, size = 0x4, scoped, tag = 'scoped memory for tpu_custom_call.1']
    #allocation7 [shape = 'u8[2048]{0}', space=vmem, size = 0x800, scoped, tag = 'input window, operand 2, single buffered']
    #allocation8 [shape = 'u8[393216]{0}', space=vmem, size = 0x60000, scoped, tag = 'input window, operand 3, single buffered']
    #allocation9 [shape = 's32[1]{0}', space=sflag, size = 0x4, scoped, tag = 'scoped memory for tpu_custom_call.1']
    #allocation10 [shape = 'u8[98304]{0}', space=vmem, size = 0x18000, scoped, tag = 'input window, operand 5, single buffered']
    #allocation11 [shape = 'u8[32768]{0}', space=vmem, size = 0x8000, scoped, tag = 'input window, operand 7, single buffered']
    #allocation12 [shape = 's32[1]{0}', space=sflag, size = 0x4, scoped, tag = 'scoped memory for tpu_custom_call.1']
    #allocation13 [shape = 'u8[32768]{0}', space=vmem, size = 0x8000, scoped, tag = 'input window, operand 9, single buffered']
    #allocation14 [shape = 'u8[4096]{0}', space=vmem, size = 0x1000, scoped, tag = 'output window, operand 0, single buffered']
    %16 = vsyncpa [#allocation3], 0
    %17 = vsyncpa [#allocation6], 0
    %18 = vsyncpa [#allocation9], 0
    %19 = vsyncpa [#allocation12], 0
    %20 = vsyncpa [#allocation4], 0
    // Predicated region
    $region2: #{tpu_custom_call.1} parent=1 // pred_check
      _
    $region3: #{tpu_custom_call.1} parent=1 // pred_check_branch
      %22 = sbr.rel (0) target = $region5
    $region4: #{tpu_custom_call.1} parent=1 // pred_region
      %24 = vsyncadd [#allocation3], 0
      %s25 = sshll.u32 %s0, 4
      %s26 = int_to_ptr.hbm [resolvable:$true] %s25
      %s27 = sshll.u32 [#allocation2], 4
      %s28 = int_to_ptr.vmem [resolvable:$true] %s27
      %33 = dma.hbm_to_vmem [thread:$0]  %s26, 128, %s28, [#allocation3], 64, 64, 4
    $region5: #{tpu_custom_call.1} parent=1 // pred_fallthru
      _
    // Predicated region
    $region6: #{tpu_custom_call.1} parent=1 // pred_check
      _
    $region7: #{tpu_custom_call.1} parent=1 // pred_check_branch
      %35 = sbr.rel (0) target = $region9
    $region8: #{tpu_custom_call.1} parent=1 // pred_region
      %37 = vsyncadd [#allocation6], 0
      %s38 = sshll.u32 %s1, 4
      %s39 = int_to_ptr.hbm [resolvable:$true] %s38
      %s40 = sshll.u32 [#allocation5], 4
      %s41 = int_to_ptr.vmem [resolvable:$true] %s40
      %46 = dma.hbm_to_vmem [thread:$0]  %s39, 512, %s41, [#allocation6], 256, 256, 16
    $region9: #{tpu_custom_call.1} parent=1 // pred_fallthru
      _
    // Predicated region
    $region10: #{tpu_custom_call.1} parent=1 // pred_check
      _
    $region11: #{tpu_custom_call.1} parent=1 // pred_check_branch
      %48 = sbr.rel (0) target = $region13
    $region12: #{tpu_custom_call.1} parent=1 // pred_region
      %50 = vsyncadd [#allocation6], 0
      %s52 = sshll.u32 %s2, 4
      %s53 = int_to_ptr.hbm [resolvable:$true] %s52
      %s54 = sshll.u32 [#allocation7], 4
      %s55 = int_to_ptr.vmem [resolvable:$true] %s54
      %57 = dma.hbm_to_vmem [thread:$0]  %s53, 64, %s55, [#allocation6]
    $region13: #{tpu_custom_call.1} parent=1 // pred_fallthru
      _
    // Predicated region
    $region14: #{tpu_custom_call.1} parent=1 // pred_check
      _
    $region15: #{tpu_custom_call.1} parent=1 // pred_check_branch
      %59 = sbr.rel (0) target = $region17
    $region16: #{tpu_custom_call.1} parent=1 // pred_region
      %61 = vsyncadd [#allocation9], 0
      %s62 = sshll.u32 %s3, 4
      %s63 = int_to_ptr.hbm [resolvable:$true] %s62
      %s64 = sshll.u32 [#allocation8], 4
      %s65 = int_to_ptr.vmem [resolvable:$true] %s64
      %70 = dma.hbm_to_vmem [thread:$0]  %s63, 12288, %s65, [#allocation9], 192, 192, 12
    $region17: #{tpu_custom_call.1} parent=1 // pred_fallthru
      _
    // Predicated region
    $region18: #{tpu_custom_call.1} parent=1 // pred_check
      _
    $region19: #{tpu_custom_call.1} parent=1 // pred_check_branch
      %72 = sbr.rel (0) target = $region21
    $region20: #{tpu_custom_call.1} parent=1 // pred_region
      _
    $region21: #{tpu_custom_call.1} parent=1 // pred_fallthru
      _
    // Predicated region
    $region22: #{tpu_custom_call.1} parent=1 // pred_check
      _
    $region23: #{tpu_custom_call.1} parent=1 // pred_check_branch
      %74 = sbr.rel (0) target = $region25
    $region24: #{tpu_custom_call.1} parent=1 // pred_region
      %76 = vsyncadd [#allocation9], 0
      %s77 = sshll.u32 %s5, 4
      %s78 = int_to_ptr.hbm [resolvable:$true] %s77
      %s79 = sshll.u32 [#allocation10], 4
      %s80 = int_to_ptr.vmem [resolvable:$true] %s79
      %85 = dma.hbm_to_vmem [thread:$0]  %s78, 3072, %s80, [#allocation9], 64, 64, 4
    $region25: #{tpu_custom_call.1} parent=1 // pred_fallthru
      _
    // Predicated region
    $region26: #{tpu_custom_call.1} parent=1 // pred_check
      _
    $region27: #{tpu_custom_call.1} parent=1 // pred_check_branch
      %87 = sbr.rel (0) target = $region29
    $region28: #{tpu_custom_call.1} parent=1 // pred_region
      _
    $region29: #{tpu_custom_call.1} parent=1 // pred_fallthru
      _
    // Predicated region
    $region30: #{tpu_custom_call.1} parent=1 // pred_check
      _
    $region31: #{tpu_custom_call.1} parent=1 // pred_check_branch
      %89 = sbr.rel (0) target = $region33
    $region32: #{tpu_custom_call.1} parent=1 // pred_region
      %91 = vsyncadd [#allocation12], 0
      %s92 = sshll.u32 %s7, 4
      %s93 = int_to_ptr.hbm [resolvable:$true] %s92
      %s94 = sshll.u32 [#allocation11], 4
      %s95 = int_to_ptr.vmem [resolvable:$true] %s94
      %100 = dma.hbm_to_vmem [thread:$0]  %s93, 1024, %s95, [#allocation12], 64, 64, 4
    $region33: #{tpu_custom_call.1} parent=1 // pred_fallthru
      _
    // Predicated region
    $region34: #{tpu_custom_call.1} parent=1 // pred_check
      _
    $region35: #{tpu_custom_call.1} parent=1 // pred_check_branch
      %102 = sbr.rel (0) target = $region37
    $region36: #{tpu_custom_call.1} parent=1 // pred_region
      _
    $region37: #{tpu_custom_call.1} parent=1 // pred_fallthru
      _
    // Predicated region
    $region38: #{tpu_custom_call.1} parent=1 // pred_check
      _
    $region39: #{tpu_custom_call.1} parent=1 // pred_check_branch
      %104 = sbr.rel (0) target = $region41
    $region40: #{tpu_custom_call.1} parent=1 // pred_region
      %106 = vsyncadd [#allocation12], 0
      %s107 = sshll.u32 %s9, 4
      %s108 = int_to_ptr.hbm [resolvable:$true] %s107
      %s109 = sshll.u32 [#allocation13], 4
      %s110 = int_to_ptr.vmem [resolvable:$true] %s109
      %115 = dma.hbm_to_vmem [thread:$0]  %s108, 1024, %s110, [#allocation12], 64, 64, 4
    $region41: #{tpu_custom_call.1} parent=1 // pred_fallthru
      _
    // Predicated region
    $region42: #{tpu_custom_call.1} parent=1 // pred_check
      _
    $region43: #{tpu_custom_call.1} parent=1 // pred_check_branch
      %117 = sbr.rel (0) target = $region45
    $region44: #{tpu_custom_call.1} parent=1 // pred_region
      _
    $region45: #{tpu_custom_call.1} parent=1 // pred_fallthru
      _
    // Predicated region
    $region46: #{tpu_custom_call.1} parent=1 // pred_check
      _
    $region47: #{tpu_custom_call.1} parent=1 // pred_check_branch
      %119 = sbr.rel (0) target = $region49
    $region48: #{tpu_custom_call.1} parent=1 // pred_region
      %121 = dma.done [#allocation3], 128
    $region49: #{tpu_custom_call.1} parent=1 // pred_fallthru
      _
    // Predicated region
    $region50: #{tpu_custom_call.1} parent=1 // pred_check
      _
    $region51: #{tpu_custom_call.1} parent=1 // pred_check_branch
      %123 = sbr.rel (0) target = $region53
    $region52: #{tpu_custom_call.1} parent=1 // pred_region
      %125 = dma.done [#allocation6], 512
    $region53: #{tpu_custom_call.1} parent=1 // pred_fallthru
      _
    // Predicated region
    $region54: #{tpu_custom_call.1} parent=1 // pred_check
      _
    $region55: #{tpu_custom_call.1} parent=1 // pred_check_branch
      %127 = sbr.rel (0) target = $region57
    $region56: #{tpu_custom_call.1} parent=1 // pred_region
      %129 = dma.done [#allocation6], 64
    $region57: #{tpu_custom_call.1} parent=1 // pred_fallthru
      _
    // Predicated region
    $region58: #{tpu_custom_call.1} parent=1 // pred_check
      _
    $region59: #{tpu_custom_call.1} parent=1 // pred_check_branch
      %131 = sbr.rel (0) target = $region61
    $region60: #{tpu_custom_call.1} parent=1 // pred_region
      %133 = dma.done [#allocation9], 12288
    $region61: #{tpu_custom_call.1} parent=1 // pred_fallthru
      _
    // Predicated region
    $region62: #{tpu_custom_call.1} parent=1 // pred_check
      _
    $region63: #{tpu_custom_call.1} parent=1 // pred_check_branch
      %135 = sbr.rel (0) target = $region65
    $region64: #{tpu_custom_call.1} parent=1 // pred_region
      %137 = dma.done [#allocation9], 3072
    $region65: #{tpu_custom_call.1} parent=1 // pred_fallthru
      _
    // Predicated region
    $region66: #{tpu_custom_call.1} parent=1 // pred_check
      _
    $region67: #{tpu_custom_call.1} parent=1 // pred_check_branch
      %139 = sbr.rel (0) target = $region69
    $region68: #{tpu_custom_call.1} parent=1 // pred_region
      %141 = dma.done [#allocation12], 1024
    $region69: #{tpu_custom_call.1} parent=1 // pred_fallthru
      _
    // Predicated region
    $region70: #{tpu_custom_call.1} parent=1 // pred_check
      _
    $region71: #{tpu_custom_call.1} parent=1 // pred_check_branch
      %143 = sbr.rel (0) target = $region73
    $region72: #{tpu_custom_call.1} parent=1 // pred_region
      %145 = dma.done [#allocation12], 1024
    $region73: #{tpu_custom_call.1} parent=1 // pred_fallthru
      _
    %v147 = vld [vmem:[#allocation2] sm:$0xf]
    %v148 = vld [vmem:[#allocation2 + $0x4] sm:$0xf]
    %v149 = vld [vmem:[#allocation5] sm:$0xff]
    %v150 = vld [vmem:[#allocation5 + $0x8] sm:$0xff]
    %v151 = vld [vmem:[#allocation5 + $0x10] sm:$0xff]
    %v152 = vld [vmem:[#allocation5 + $0x18] sm:$0xff]
    %v153 = vld [vmem:[#allocation7] sm:$0xf]
    %v155 = vperm.slane %v153, 0
    %v156 = vperm.slane %v153, 1
    %v157 = vperm.slane %v153, 2
    %v158 = vperm.slane %v153, 3
    %v165 = vunpack.c.l.b16 %v147
    %v166 = vunpack.c.l.b16 %v148
    %v167 = vpack.c.b16 %v166, %v165
    %v172 = vunpack.c.l.b16 %v149
    %v173 = vunpack.c.h.b16 %v149
    %v174 = vunpack.c.l.b16 %v150
    %v175 = vunpack.c.h.b16 %v150
    %v176 = vunpack.c.l.b16 %v151
    %v177 = vunpack.c.h.b16 %v151
    %v178 = vunpack.c.l.b16 %v152
    %v179 = vunpack.c.h.b16 %v152
    %v180 = vpack.c.b16 %v176, %v172
    %v181 = vpack.c.b16 %v177, %v173
    %v182 = vpack.c.b16 %v178, %v174
    %v183 = vpack.c.b16 %v179, %v175
    %vm188 = vcmask 130048
    %v190 = vsel %vm188, %v167, 0
    %192 = vmatpush.bf16.msra.mxu0 0
    %193 = vmatpush.bf16.msra.mxu0 0
    %194 = vmatpush.bf16.msra.mxu0 0
    %195 = vmatpush.bf16.msra.mxu0 0
    %196 = vmatpush.bf16.msra.mxu0 0
    %197 = vmatpush.bf16.msra.mxu0 0
    %198 = vmatpush.bf16.msra.mxu0 0
    %199 = vmatpush.bf16.msra.mxu0 %v180
    %200 = vmatmul.bf16.gmra.mxu0 %v190
    %v201 = vpop.f32.mrf.mxu0
    %v202 = vadd.f32 %v155, %v201
    %v203 = vpop.f32.mrf.mxu0
    %v204 = vadd.f32 %v155, %v203
    %205 = vdwg.mxu0
    %206 = vmatpush.bf16.msra.mxu0 0
    %207 = vmatpush.bf16.msra.mxu0 0
    %208 = vmatpush.bf16.msra.mxu0 0
    %209 = vmatpush.bf16.msra.mxu0 0
    %210 = vmatpush.bf16.msra.mxu0 0
    %211 = vmatpush.bf16.msra.mxu0 0
    %212 = vmatpush.bf16.msra.mxu0 0
    %213 = vmatpush.bf16.msra.mxu0 %v181
    %214 = vmatmul.bf16.gmra.mxu0 %v190
    %v215 = vpop.f32.mrf.mxu0
    %v216 = vadd.f32 %v156, %v215
    %v217 = vpop.f32.mrf.mxu0
    %v218 = vadd.f32 %v156, %v217
    %219 = vdwg.mxu0
    %220 = vmatpush.bf16.msra.mxu0 0
    %221 = vmatpush.bf16.msra.mxu0 0
    %222 = vmatpush.bf16.msra.mxu0 0
    %223 = vmatpush.bf16.msra.mxu0 0
    %224 = vmatpush.bf16.msra.mxu0 0
    %225 = vmatpush.bf16.msra.mxu0 0
    %226 = vmatpush.bf16.msra.mxu0 0
    %227 = vmatpush.bf16.msra.mxu0 %v182
    %228 = vmatmul.bf16.gmra.mxu0 %v190
    %v229 = vpop.f32.mrf.mxu0
    %v230 = vadd.f32 %v157, %v229
    %v231 = vpop.f32.mrf.mxu0
    %v232 = vadd.f32 %v157, %v231
    %233 = vdwg.mxu0
    %234 = vmatpush.bf16.msra.mxu0 0
    %235 = vmatpush.bf16.msra.mxu0 0
    %236 = vmatpush.bf16.msra.mxu0 0
    %237 = vmatpush.bf16.msra.mxu0 0
    %238 = vmatpush.bf16.msra.mxu0 0
    %239 = vmatpush.bf16.msra.mxu0 0
    %240 = vmatpush.bf16.msra.mxu0 0
    %241 = vmatpush.bf16.msra.mxu0 %v183
    %242 = vmatmul.bf16.gmra.mxu0 %v190
    %v243 = vpop.f32.mrf.mxu0
    %v244 = vadd.f32 %v158, %v243
    %v245 = vpop.f32.mrf.mxu0
    %v246 = vadd.f32 %v158, %v245
    %247 = vdwg.mxu0
    %v248 = vmax.f32 %v202, 0.0
    %v249 = vmax.f32 %v216, 0.0
    %v250 = vmax.f32 %v230, 0.0
    %v251 = vmax.f32 %v244, 0.0
    %v252 = vmax.f32 %v204, 0.0
    %v253 = vmax.f32 %v218, 0.0
    %v254 = vmax.f32 %v232, 0.0
    %v255 = vmax.f32 %v246, 0.0
    %v256 = vpack.c.bf16 %v252, %v248
    %v257 = vpack.c.bf16 %v253, %v249
    %v258 = vpack.c.bf16 %v254, %v250
    %v259 = vpack.c.bf16 %v255, %v251
    %v260 = vld [vmem:[#allocation8] sm:$0xff]
    %v261 = vld [vmem:[#allocation8 + $0x8] sm:$0xf]
    %v262 = vld [vmem:[#allocation8 + $0xc] sm:$0xff]
    %v263 = vld [vmem:[#allocation8 + $0x14] sm:$0xf]
    %v264 = vld [vmem:[#allocation8 + $0x18] sm:$0xff]
    %v265 = vld [vmem:[#allocation8 + $0x20] sm:$0xf]
    %v266 = vld [vmem:[#allocation8 + $0x24] sm:$0xff]
    %v267 = vld [vmem:[#allocation8 + $0x2c] sm:$0xf]
    %v268 = vld [vmem:[#allocation8 + $0x30] sm:$0xff]
    %v269 = vld [vmem:[#allocation8 + $0x38] sm:$0xf]
    %v270 = vld [vmem:[#allocation8 + $0x3c] sm:$0xff]
    %v271 = vld [vmem:[#allocation8 + $0x44] sm:$0xf]
    %v272 = vld [vmem:[#allocation8 + $0x48] sm:$0xff]
    %v273 = vld [vmem:[#allocation8 + $0x50] sm:$0xf]
    %v274 = vld [vmem:[#allocation8 + $0x54] sm:$0xff]
    %v275 = vld [vmem:[#allocation8 + $0x5c] sm:$0xf]
    %v276 = vld [vmem:[#allocation8 + $0x60] sm:$0xff]
    %v277 = vld [vmem:[#allocation8 + $0x68] sm:$0xf]
    %v278 = vld [vmem:[#allocation8 + $0x6c] sm:$0xff]
    %v279 = vld [vmem:[#allocation8 + $0x74] sm:$0xf]
    %v280 = vld [vmem:[#allocation8 + $0x78] sm:$0xff]
    %v281 = vld [vmem:[#allocation8 + $0x80] sm:$0xf]
    %v282 = vld [vmem:[#allocation8 + $0x84] sm:$0xff]
    %v283 = vld [vmem:[#allocation8 + $0x8c] sm:$0xf]
    %v284 = vld [vmem:[#allocation8 + $0x90] sm:$0xff]
    %v285 = vld [vmem:[#allocation8 + $0x98] sm:$0xf]
    %v286 = vld [vmem:[#allocation8 + $0x9c] sm:$0xff]
    %v287 = vld [vmem:[#allocation8 + $0xa4] sm:$0xf]
    %v288 = vld [vmem:[#allocation8 + $0xa8] sm:$0xff]
    %v289 = vld [vmem:[#allocation8 + $0xb0] sm:$0xf]
    %v290 = vld [vmem:[#allocation8 + $0xb4] sm:$0xff]
    %v291 = vld [vmem:[#allocation8 + $0xbc] sm:$0xf]
    %v292 = vld [vmem:[#allocation8 + $0xc0] sm:$0xff]
    %v293 = vld [vmem:[#allocation8 + $0xc8] sm:$0xf]
    %v294 = vld [vmem:[#allocation8 + $0xcc] sm:$0xff]
    %v295 = vld [vmem:[#allocation8 + $0xd4] sm:$0xf]
    %v296 = vld [vmem:[#allocation8 + $0xd8] sm:$0xff]
    %v297 = vld [vmem:[#allocation8 + $0xe0] sm:$0xf]
    %v298 = vld [vmem:[#allocation8 + $0xe4] sm:$0xff]
    %v299 = vld [vmem:[#allocation8 + $0xec] sm:$0xf]
    %v300 = vld [vmem:[#allocation8 + $0xf0] sm:$0xff]
    %v301 = vld [vmem:[#allocation8 + $0xf8] sm:$0xf]
    %v302 = vld [vmem:[#allocation8 + $0xfc] sm:$0xff]
    %v303 = vld [vmem:[#allocation8 + $0x104] sm:$0xf]
    %v304 = vld [vmem:[#allocation8 + $0x108] sm:$0xff]
    %v305 = vld [vmem:[#allocation8 + $0x110] sm:$0xf]
    %v306 = vld [vmem:[#allocation8 + $0x114] sm:$0xff]
    %v307 = vld [vmem:[#allocation8 + $0x11c] sm:$0xf]
    %v308 = vld [vmem:[#allocation8 + $0x120] sm:$0xff]
    %v309 = vld [vmem:[#allocation8 + $0x128] sm:$0xf]
    %v310 = vld [vmem:[#allocation8 + $0x12c] sm:$0xff]
    %v311 = vld [vmem:[#allocation8 + $0x134] sm:$0xf]
    %v312 = vld [vmem:[#allocation8 + $0x138] sm:$0xff]
    %v313 = vld [vmem:[#allocation8 + $0x140] sm:$0xf]
    %v314 = vld [vmem:[#allocation8 + $0x144] sm:$0xff]
    %v315 = vld [vmem:[#allocation8 + $0x14c] sm:$0xf]
    %v316 = vld [vmem:[#allocation8 + $0x150] sm:$0xff]
    %v317 = vld [vmem:[#allocation8 + $0x158] sm:$0xf]
    %v318 = vld [vmem:[#allocation8 + $0x15c] sm:$0xff]
    %v319 = vld [vmem:[#allocation8 + $0x164] sm:$0xf]
    %v320 = vld [vmem:[#allocation8 + $0x168] sm:$0xff]
    %v321 = vld [vmem:[#allocation8 + $0x170] sm:$0xf]
    %v322 = vld [vmem:[#allocation8 + $0x174] sm:$0xff]
    %v323 = vld [vmem:[#allocation8 + $0x17c] sm:$0xf]
    %v324 = vld [vmem:[#allocation8 + $0x180] sm:$0xff]
    %v325 = vld [vmem:[#allocation8 + $0x188] sm:$0xf]
    %v326 = vld [vmem:[#allocation8 + $0x18c] sm:$0xff]
    %v327 = vld [vmem:[#allocation8 + $0x194] sm:$0xf]
    %v328 = vld [vmem:[#allocation8 + $0x198] sm:$0xff]
    %v329 = vld [vmem:[#allocation8 + $0x1a0] sm:$0xf]
    %v330 = vld [vmem:[#allocation8 + $0x1a4] sm:$0xff]
    %v331 = vld [vmem:[#allocation8 + $0x1ac] sm:$0xf]
    %v332 = vld [vmem:[#allocation8 + $0x1b0] sm:$0xff]
    %v333 = vld [vmem:[#allocation8 + $0x1b8] sm:$0xf]
    %v334 = vld [vmem:[#allocation8 + $0x1bc] sm:$0xff]
    %v335 = vld [vmem:[#allocation8 + $0x1c4] sm:$0xf]
    %v336 = vld [vmem:[#allocation8 + $0x1c8] sm:$0xff]
    %v337 = vld [vmem:[#allocation8 + $0x1d0] sm:$0xf]
    %v338 = vld [vmem:[#allocation8 + $0x1d4] sm:$0xff]
    %v339 = vld [vmem:[#allocation8 + $0x1dc] sm:$0xf]
    %v340 = vld [vmem:[#allocation8 + $0x1e0] sm:$0xff]
    %v341 = vld [vmem:[#allocation8 + $0x1e8] sm:$0xf]
    %v342 = vld [vmem:[#allocation8 + $0x1ec] sm:$0xff]
    %v343 = vld [vmem:[#allocation8 + $0x1f4] sm:$0xf]
    %v344 = vld [vmem:[#allocation8 + $0x1f8] sm:$0xff]
    %v345 = vld [vmem:[#allocation8 + $0x200] sm:$0xf]
    %v346 = vld [vmem:[#allocation8 + $0x204] sm:$0xff]
    %v347 = vld [vmem:[#allocation8 + $0x20c] sm:$0xf]
    %v348 = vld [vmem:[#allocation8 + $0x210] sm:$0xff]
    %v349 = vld [vmem:[#allocation8 + $0x218] sm:$0xf]
    %v350 = vld [vmem:[#allocation8 + $0x21c] sm:$0xff]
    %v351 = vld [vmem:[#allocation8 + $0x224] sm:$0xf]
    %v352 = vld [vmem:[#allocation8 + $0x228] sm:$0xff]
    %v353 = vld [vmem:[#allocation8 + $0x230] sm:$0xf]
    %v354 = vld [vmem:[#allocation8 + $0x234] sm:$0xff]
    %v355 = vld [vmem:[#allocation8 + $0x23c] sm:$0xf]
    %v356 = vld [vmem:[#allocation8 + $0x240] sm:$0xff]
    %v357 = vld [vmem:[#allocation8 + $0x248] sm:$0xf]
    %v358 = vld [vmem:[#allocation8 + $0x24c] sm:$0xff]
    %v359 = vld [vmem:[#allocation8 + $0x254] sm:$0xf]
    %v360 = vld [vmem:[#allocation8 + $0x258] sm:$0xff]
    %v361 = vld [vmem:[#allocation8 + $0x260] sm:$0xf]
    %v362 = vld [vmem:[#allocation8 + $0x264] sm:$0xff]
    %v363 = vld [vmem:[#allocation8 + $0x26c] sm:$0xf]
    %v364 = vld [vmem:[#allocation8 + $0x270] sm:$0xff]
    %v365 = vld [vmem:[#allocation8 + $0x278] sm:$0xf]
    %v366 = vld [vmem:[#allocation8 + $0x27c] sm:$0xff]
    %v367 = vld [vmem:[#allocation8 + $0x284] sm:$0xf]
    %v368 = vld [vmem:[#allocation8 + $0x288] sm:$0xff]
    %v369 = vld [vmem:[#allocation8 + $0x290] sm:$0xf]
    %v370 = vld [vmem:[#allocation8 + $0x294] sm:$0xff]
    %v371 = vld [vmem:[#allocation8 + $0x29c] sm:$0xf]
    %v372 = vld [vmem:[#allocation8 + $0x2a0] sm:$0xff]
    %v373 = vld [vmem:[#allocation8 + $0x2a8] sm:$0xf]
    %v374 = vld [vmem:[#allocation8 + $0x2ac] sm:$0xff]
    %v375 = vld [vmem:[#allocation8 + $0x2b4] sm:$0xf]
    %v376 = vld [vmem:[#allocation8 + $0x2b8] sm:$0xff]
    %v377 = vld [vmem:[#allocation8 + $0x2c0] sm:$0xf]
    %v378 = vld [vmem:[#allocation8 + $0x2c4] sm:$0xff]
    %v379 = vld [vmem:[#allocation8 + $0x2cc] sm:$0xf]
    %v380 = vld [vmem:[#allocation8 + $0x2d0] sm:$0xff]
    %v381 = vld [vmem:[#allocation8 + $0x2d8] sm:$0xf]
    %v382 = vld [vmem:[#allocation8 + $0x2dc] sm:$0xff]
    %v383 = vld [vmem:[#allocation8 + $0x2e4] sm:$0xf]
    %v384 = vld [vmem:[#allocation8 + $0x2e8] sm:$0xff]
    %v385 = vld [vmem:[#allocation8 + $0x2f0] sm:$0xf]
    %v386 = vld [vmem:[#allocation8 + $0x2f4] sm:$0xff]
    %v387 = vld [vmem:[#allocation8 + $0x2fc] sm:$0xf]
    %v388 = vld [vmem:[%s4] sm:$0x7]
    %v390 = vperm.slane %v388, 0
    %v391 = vperm.slane %v388, 1
    %v392 = vperm.slane %v388, 2
    %v524 = vunpack.c.l.b16 %v260
    %v525 = vunpack.c.h.b16 %v260
    %v526 = vunpack.c.l.b16 %v261
    %v527 = vunpack.c.l.b16 %v262
    %v528 = vunpack.c.h.b16 %v262
    %v529 = vunpack.c.l.b16 %v263
    %v530 = vunpack.c.l.b16 %v264
    %v531 = vunpack.c.h.b16 %v264
    %v532 = vunpack.c.l.b16 %v265
    %v533 = vunpack.c.l.b16 %v266
    %v534 = vunpack.c.h.b16 %v266
    %v535 = vunpack.c.l.b16 %v267
    %v536 = vunpack.c.l.b16 %v268
    %v537 = vunpack.c.h.b16 %v268
    %v538 = vunpack.c.l.b16 %v269
    %v539 = vunpack.c.l.b16 %v270
    %v540 = vunpack.c.h.b16 %v270
    %v541 = vunpack.c.l.b16 %v271
    %v542 = vunpack.c.l.b16 %v272
    %v543 = vunpack.c.h.b16 %v272
    %v544 = vunpack.c.l.b16 %v273
    %v545 = vunpack.c.l.b16 %v274
    %v546 = vunpack.c.h.b16 %v274
    %v547 = vunpack.c.l.b16 %v275
    %v548 = vunpack.c.l.b16 %v276
    %v549 = vunpack.c.h.b16 %v276
    %v550 = vunpack.c.l.b16 %v277
    %v551 = vunpack.c.l.b16 %v278
    %v552 = vunpack.c.h.b16 %v278
    %v553 = vunpack.c.l.b16 %v279
    %v554 = vunpack.c.l.b16 %v280
    %v555 = vunpack.c.h.b16 %v280
    %v556 = vunpack.c.l.b16 %v281
    %v557 = vunpack.c.l.b16 %v282
    %v558 = vunpack.c.h.b16 %v282
    %v559 = vunpack.c.l.b16 %v283
    %v560 = vunpack.c.l.b16 %v284
    %v561 = vunpack.c.h.b16 %v284
    %v562 = vunpack.c.l.b16 %v285
    %v563 = vunpack.c.l.b16 %v286
    %v564 = vunpack.c.h.b16 %v286
    %v565 = vunpack.c.l.b16 %v287
    %v566 = vunpack.c.l.b16 %v288
    %v567 = vunpack.c.h.b16 %v288
    %v568 = vunpack.c.l.b16 %v289
    %v569 = vunpack.c.l.b16 %v290
    %v570 = vunpack.c.h.b16 %v290
    %v571 = vunpack.c.l.b16 %v291
    %v572 = vunpack.c.l.b16 %v292
    %v573 = vunpack.c.h.b16 %v292
    %v574 = vunpack.c.l.b16 %v293
    %v575 = vunpack.c.l.b16 %v294
    %v576 = vunpack.c.h.b16 %v294
    %v577 = vunpack.c.l.b16 %v295
    %v578 = vunpack.c.l.b16 %v296
    %v579 = vunpack.c.h.b16 %v296
    %v580 = vunpack.c.l.b16 %v297
    %v581 = vunpack.c.l.b16 %v298
    %v582 = vunpack.c.h.b16 %v298
    %v583 = vunpack.c.l.b16 %v299
    %v584 = vunpack.c.l.b16 %v300
    %v585 = vunpack.c.h.b16 %v300
    %v586 = vunpack.c.l.b16 %v301
    %v587 = vunpack.c.l.b16 %v302
    %v588 = vunpack.c.h.b16 %v302
    %v589 = vunpack.c.l.b16 %v303
    %v590 = vunpack.c.l.b16 %v304
    %v591 = vunpack.c.h.b16 %v304
    %v592 = vunpack.c.l.b16 %v305
    %v593 = vunpack.c.l.b16 %v306
    %v594 = vunpack.c.h.b16 %v306
    %v595 = vunpack.c.l.b16 %v307
    %v596 = vunpack.c.l.b16 %v308
    %v597 = vunpack.c.h.b16 %v308
    %v598 = vunpack.c.l.b16 %v309
    %v599 = vunpack.c.l.b16 %v310
    %v600 = vunpack.c.h.b16 %v310
    %v601 = vunpack.c.l.b16 %v311
    %v602 = vunpack.c.l.b16 %v312
    %v603 = vunpack.c.h.b16 %v312
    %v604 = vunpack.c.l.b16 %v313
    %v605 = vunpack.c.l.b16 %v314
    %v606 = vunpack.c.h.b16 %v314
    %v607 = vunpack.c.l.b16 %v315
    %v608 = vunpack.c.l.b16 %v316
    %v609 = vunpack.c.h.b16 %v316
    %v610 = vunpack.c.l.b16 %v317
    %v611 = vunpack.c.l.b16 %v318
    %v612 = vunpack.c.h.b16 %v318
    %v613 = vunpack.c.l.b16 %v319
    %v614 = vunpack.c.l.b16 %v320
    %v615 = vunpack.c.h.b16 %v320
    %v616 = vunpack.c.l.b16 %v321
    %v617 = vunpack.c.l.b16 %v322
    %v618 = vunpack.c.h.b16 %v322
    %v619 = vunpack.c.l.b16 %v323
    %v620 = vunpack.c.l.b16 %v324
    %v621 = vunpack.c.h.b16 %v324
    %v622 = vunpack.c.l.b16 %v325
    %v623 = vunpack.c.l.b16 %v326
    %v624 = vunpack.c.h.b16 %v326
    %v625 = vunpack.c.l.b16 %v327
    %v626 = vunpack.c.l.b16 %v328
    %v627 = vunpack.c.h.b16 %v328
    %v628 = vunpack.c.l.b16 %v329
    %v629 = vunpack.c.l.b16 %v330
    %v630 = vunpack.c.h.b16 %v330
    %v631 = vunpack.c.l.b16 %v331
    %v632 = vunpack.c.l.b16 %v332
    %v633 = vunpack.c.h.b16 %v332
    %v634 = vunpack.c.l.b16 %v333
    %v635 = vunpack.c.l.b16 %v334
    %v636 = vunpack.c.h.b16 %v334
    %v637 = vunpack.c.l.b16 %v335
    %v638 = vunpack.c.l.b16 %v336
    %v639 = vunpack.c.h.b16 %v336
    %v640 = vunpack.c.l.b16 %v337
    %v641 = vunpack.c.l.b16 %v338
    %v642 = vunpack.c.h.b16 %v338
    %v643 = vunpack.c.l.b16 %v339
    %v644 = vunpack.c.l.b16 %v340
    %v645 = vunpack.c.h.b16 %v340
    %v646 = vunpack.c.l.b16 %v341
    %v647 = vunpack.c.l.b16 %v342
    %v648 = vunpack.c.h.b16 %v342
    %v649 = vunpack.c.l.b16 %v343
    %v650 = vunpack.c.l.b16 %v344
    %v651 = vunpack.c.h.b16 %v344
    %v652 = vunpack.c.l.b16 %v345
    %v653 = vunpack.c.l.b16 %v346
    %v654 = vunpack.c.h.b16 %v346
    %v655 = vunpack.c.l.b16 %v347
    %v656 = vunpack.c.l.b16 %v348
    %v657 = vunpack.c.h.b16 %v348
    %v658 = vunpack.c.l.b16 %v349
    %v659 = vunpack.c.l.b16 %v350
    %v660 = vunpack.c.h.b16 %v350
    %v661 = vunpack.c.l.b16 %v351
    %v662 = vunpack.c.l.b16 %v352
    %v663 = vunpack.c.h.b16 %v352
    %v664 = vunpack.c.l.b16 %v353
    %v665 = vunpack.c.l.b16 %v354
    %v666 = vunpack.c.h.b16 %v354
    %v667 = vunpack.c.l.b16 %v355
    %v668 = vunpack.c.l.b16 %v356
    %v669 = vunpack.c.h.b16 %v356
    %v670 = vunpack.c.l.b16 %v357
    %v671 = vunpack.c.l.b16 %v358
    %v672 = vunpack.c.h.b16 %v358
    %v673 = vunpack.c.l.b16 %v359
    %v674 = vunpack.c.l.b16 %v360
    %v675 = vunpack.c.h.b16 %v360
    %v676 = vunpack.c.l.b16 %v361
    %v677 = vunpack.c.l.b16 %v362
    %v678 = vunpack.c.h.b16 %v362
    %v679 = vunpack.c.l.b16 %v363
    %v680 = vunpack.c.l.b16 %v364
    %v681 = vunpack.c.h.b16 %v364
    %v682 = vunpack.c.l.b16 %v365
    %v683 = vunpack.c.l.b16 %v366
    %v684 = vunpack.c.h.b16 %v366
    %v685 = vunpack.c.l.b16 %v367
    %v686 = vunpack.c.l.b16 %v368
    %v687 = vunpack.c.h.b16 %v368
    %v688 = vunpack.c.l.b16 %v369
    %v689 = vunpack.c.l.b16 %v370
    %v690 = vunpack.c.h.b16 %v370
    %v691 = vunpack.c.l.b16 %v371
    %v692 = vunpack.c.l.b16 %v372
    %v693 = vunpack.c.h.b16 %v372
    %v694 = vunpack.c.l.b16 %v373
    %v695 = vunpack.c.l.b16 %v374
    %v696 = vunpack.c.h.b16 %v374
    %v697 = vunpack.c.l.b16 %v375
    %v698 = vunpack.c.l.b16 %v376
    %v699 = vunpack.c.h.b16 %v376
    %v700 = vunpack.c.l.b16 %v377
    %v701 = vunpack.c.l.b16 %v378
    %v702 = vunpack.c.h.b16 %v378
    %v703 = vunpack.c.l.b16 %v379
    %v704 = vunpack.c.l.b16 %v380
    %v705 = vunpack.c.h.b16 %v380
    %v706 = vunpack.c.l.b16 %v381
    %v707 = vunpack.c.l.b16 %v382
    %v708 = vunpack.c.h.b16 %v382
    %v709 = vunpack.c.l.b16 %v383
    %v710 = vunpack.c.l.b16 %v384
    %v711 = vunpack.c.h.b16 %v384
    %v712 = vunpack.c.l.b16 %v385
    %v713 = vunpack.c.l.b16 %v386
    %v714 = vunpack.c.h.b16 %v386
    %v715 = vunpack.c.l.b16 %v387
    %v716 = vpack.c.b16 %v527, %v524
    %v717 = vpack.c.b16 %v528, %v525
    %v718 = vpack.c.b16 %v529, %v526
    %v719 = vpack.c.b16 %v533, %v530
    %v720 = vpack.c.b16 %v534, %v531
    %v721 = vpack.c.b16 %v535, %v532
    %v722 = vpack.c.b16 %v539, %v536
    %v723 = vpack.c.b16 %v540, %v537
    %v724 = vpack.c.b16 %v541, %v538
    %v725 = vpack.c.b16 %v545, %v542
    %v726 = vpack.c.b16 %v546, %v543
    %v727 = vpack.c.b16 %v547, %v544
    %v728 = vpack.c.b16 %v551, %v548
    %v729 = vpack.c.b16 %v552, %v549
    %v730 = vpack.c.b16 %v553, %v550
    %v731 = vpack.c.b16 %v557, %v554
    %v732 = vpack.c.b16 %v558, %v555
    %v733 = vpack.c.b16 %v559, %v556
    %v734 = vpack.c.b16 %v563, %v560
    %v735 = vpack.c.b16 %v564, %v561
    %v736 = vpack.c.b16 %v565, %v562
    %v737 = vpack.c.b16 %v569, %v566
    %v738 = vpack.c.b16 %v570, %v567
    %v739 = vpack.c.b16 %v571, %v568
    %v740 = vpack.c.b16 %v575, %v572
    %v741 = vpack.c.b16 %v576, %v573
    %v742 = vpack.c.b16 %v577, %v574
    %v743 = vpack.c.b16 %v581, %v578
    %v744 = vpack.c.b16 %v582, %v579
    %v745 = vpack.c.b16 %v583, %v580
    %v746 = vpack.c.b16 %v587, %v584
    %v747 = vpack.c.b16 %v588, %v585
    %v748 = vpack.c.b16 %v589, %v586
    %v749 = vpack.c.b16 %v593, %v590
    %v750 = vpack.c.b16 %v594, %v591
    %v751 = vpack.c.b16 %v595, %v592
    %v752 = vpack.c.b16 %v599, %v596
    %v753 = vpack.c.b16 %v600, %v597
    %v754 = vpack.c.b16 %v601, %v598
    %v755 = vpack.c.b16 %v605, %v602
    %v756 = vpack.c.b16 %v606, %v603
    %v757 = vpack.c.b16 %v607, %v604
    %v758 = vpack.c.b16 %v611, %v608
    %v759 = vpack.c.b16 %v612, %v609
    %v760 = vpack.c.b16 %v613, %v610
    %v761 = vpack.c.b16 %v617, %v614
    %v762 = vpack.c.b16 %v618, %v615
    %v763 = vpack.c.b16 %v619, %v616
    %v764 = vpack.c.b16 %v623, %v620
    %v765 = vpack.c.b16 %v624, %v621
    %v766 = vpack.c.b16 %v625, %v622
    %v767 = vpack.c.b16 %v629, %v626
    %v768 = vpack.c.b16 %v630, %v627
    %v769 = vpack.c.b16 %v631, %v628
    %v770 = vpack.c.b16 %v635, %v632
    %v771 = vpack.c.b16 %v636, %v633
    %v772 = vpack.c.b16 %v637, %v634
    %v773 = vpack.c.b16 %v641, %v638
    %v774 = vpack.c.b16 %v642, %v639
    %v775 = vpack.c.b16 %v643, %v640
    %v776 = vpack.c.b16 %v647, %v644
    %v777 = vpack.c.b16 %v648, %v645
    %v778 = vpack.c.b16 %v649, %v646
    %v779 = vpack.c.b16 %v653, %v650
    %v780 = vpack.c.b16 %v654, %v651
    %v781 = vpack.c.b16 %v655, %v652
    %v782 = vpack.c.b16 %v659, %v656
    %v783 = vpack.c.b16 %v660, %v657
    %v784 = vpack.c.b16 %v661, %v658
    %v785 = vpack.c.b16 %v665, %v662
    %v786 = vpack.c.b16 %v666, %v663
    %v787 = vpack.c.b16 %v667, %v664
    %v788 = vpack.c.b16 %v671, %v668
    %v789 = vpack.c.b16 %v672, %v669
    %v790 = vpack.c.b16 %v673, %v670
    %v791 = vpack.c.b16 %v677, %v674
    %v792 = vpack.c.b16 %v678, %v675
    %v793 = vpack.c.b16 %v679, %v676
    %v794 = vpack.c.b16 %v683, %v680
    %v795 = vpack.c.b16 %v684, %v681
    %v796 = vpack.c.b16 %v685, %v682
    %v797 = vpack.c.b16 %v689, %v686
    %v798 = vpack.c.b16 %v690, %v687
    %v799 = vpack.c.b16 %v691, %v688
    %v800 = vpack.c.b16 %v695, %v692
    %v801 = vpack.c.b16 %v696, %v693
    %v802 = vpack.c.b16 %v697, %v694
    %v803 = vpack.c.b16 %v701, %v698
    %v804 = vpack.c.b16 %v702, %v699
    %v805 = vpack.c.b16 %v703, %v700
    %v806 = vpack.c.b16 %v707, %v704
    %v807 = vpack.c.b16 %v708, %v705
    %v808 = vpack.c.b16 %v709, %v706
    %v809 = vpack.c.b16 %v713, %v710
    %v810 = vpack.c.b16 %v714, %v711
    %v811 = vpack.c.b16 %v715, %v712
    %908 = vmatpush.bf16.msra.mxu0 %v737
    %909 = vmatpush.bf16.msra.mxu0 %v734
    %910 = vmatpush.bf16.msra.mxu0 %v731
    %911 = vmatpush.bf16.msra.mxu0 %v728
    %912 = vmatpush.bf16.msra.mxu0 %v725
    %913 = vmatpush.bf16.msra.mxu0 %v722
    %914 = vmatpush.bf16.msra.mxu0 %v719
    %915 = vmatpush.bf16.msra.mxu0 %v716
    %916 = vmatmul.bf16.gmra.mxu0 %v256
    %v917 = vpop.f32.mrf.mxu0
    %v918 = vadd.f32 %v390, %v917
    %v919 = vpop.f32.mrf.mxu0
    %v920 = vadd.f32 %v390, %v919
    %921 = vdwg.mxu0
    %922 = vmatpush.bf16.msra.mxu0 %v761
    %923 = vmatpush.bf16.msra.mxu0 %v758
    %924 = vmatpush.bf16.msra.mxu0 %v755
    %925 = vmatpush.bf16.msra.mxu0 %v752
    %926 = vmatpush.bf16.msra.mxu0 %v749
    %927 = vmatpush.bf16.msra.mxu0 %v746
    %928 = vmatpush.bf16.msra.mxu0 %v743
    %929 = vmatpush.bf16.msra.mxu0 %v740
    %930 = vmatmul.bf16.gmra.mxu0 %v257
    %v931 = vpop.f32.mrf.mxu0
    %v932 = vadd.f32 %v918, %v931
    %v933 = vpop.f32.mrf.mxu0
    %v934 = vadd.f32 %v920, %v933
    %935 = vdwg.mxu0
    %936 = vmatpush.bf16.msra.mxu0 %v785
    %937 = vmatpush.bf16.msra.mxu0 %v782
    %938 = vmatpush.bf16.msra.mxu0 %v779
    %939 = vmatpush.bf16.msra.mxu0 %v776
    %940 = vmatpush.bf16.msra.mxu0 %v773
    %941 = vmatpush.bf16.msra.mxu0 %v770
    %942 = vmatpush.bf16.msra.mxu0 %v767
    %943 = vmatpush.bf16.msra.mxu0 %v764
    %944 = vmatmul.bf16.gmra.mxu0 %v258
    %v945 = vpop.f32.mrf.mxu0
    %v946 = vadd.f32 %v932, %v945
    %v947 = vpop.f32.mrf.mxu0
    %v948 = vadd.f32 %v934, %v947
    %949 = vdwg.mxu0
    %950 = vmatpush.bf16.msra.mxu0 %v809
    %951 = vmatpush.bf16.msra.mxu0 %v806
    %952 = vmatpush.bf16.msra.mxu0 %v803
    %953 = vmatpush.bf16.msra.mxu0 %v800
    %954 = vmatpush.bf16.msra.mxu0 %v797
    %955 = vmatpush.bf16.msra.mxu0 %v794
    %956 = vmatpush.bf16.msra.mxu0 %v791
    %957 = vmatpush.bf16.msra.mxu0 %v788
    %958 = vmatmul.bf16.gmra.mxu0 %v259
    %v959 = vpop.f32.mrf.mxu0
    %v960 = vadd.f32 %v946, %v959
    %v961 = vpop.f32.mrf.mxu0
    %v962 = vadd.f32 %v948, %v961
    %963 = vdwg.mxu0
    %964 = vmatpush.bf16.msra.mxu0 %v738
    %965 = vmatpush.bf16.msra.mxu0 %v735
    %966 = vmatpush.bf16.msra.mxu0 %v732
    %967 = vmatpush.bf16.msra.mxu0 %v729
    %968 = vmatpush.bf16.msra.mxu0 %v726
    %969 = vmatpush.bf16.msra.mxu0 %v723
    %970 = vmatpush.bf16.msra.mxu0 %v720
    %971 = vmatpush.bf16.msra.mxu0 %v717
    %972 = vmatmul.bf16.gmra.mxu0 %v256
    %v973 = vpop.f32.mrf.mxu0
    %v974 = vadd.f32 %v391, %v973
    %v975 = vpop.f32.mrf.mxu0
    %v976 = vadd.f32 %v391, %v975
    %977 = vdwg.mxu0
    %978 = vmatpush.bf16.msra.mxu0 %v762
    %979 = vmatpush.bf16.msra.mxu0 %v759
    %980 = vmatpush.bf16.msra.mxu0 %v756
    %981 = vmatpush.bf16.msra.mxu0 %v753
    %982 = vmatpush.bf16.msra.mxu0 %v750
    %983 = vmatpush.bf16.msra.mxu0 %v747
    %984 = vmatpush.bf16.msra.mxu0 %v744
    %985 = vmatpush.bf16.msra.mxu0 %v741
    %986 = vmatmul.bf16.gmra.mxu0 %v257
    %v987 = vpop.f32.mrf.mxu0
    %v988 = vadd.f32 %v974, %v987
    %v989 = vpop.f32.mrf.mxu0
    %v990 = vadd.f32 %v976, %v989
    %991 = vdwg.mxu0
    %992 = vmatpush.bf16.msra.mxu0 %v786
    %993 = vmatpush.bf16.msra.mxu0 %v783
    %994 = vmatpush.bf16.msra.mxu0 %v780
    %995 = vmatpush.bf16.msra.mxu0 %v777
    %996 = vmatpush.bf16.msra.mxu0 %v774
    %997 = vmatpush.bf16.msra.mxu0 %v771
    %998 = vmatpush.bf16.msra.mxu0 %v768
    %999 = vmatpush.bf16.msra.mxu0 %v765
    %1000 = vmatmul.bf16.gmra.mxu0 %v258
    %v1001 = vpop.f32.mrf.mxu0
    %v1002 = vadd.f32 %v988, %v1001
    %v1003 = vpop.f32.mrf.mxu0
    %v1004 = vadd.f32 %v990, %v1003
    %1005 = vdwg.mxu0
    %1006 = vmatpush.bf16.msra.mxu0 %v810
    %1007 = vmatpush.bf16.msra.mxu0 %v807
    %1008 = vmatpush.bf16.msra.mxu0 %v804
    %1009 = vmatpush.bf16.msra.mxu0 %v801
    %1010 = vmatpush.bf16.msra.mxu0 %v798
    %1011 = vmatpush.bf16.msra.mxu0 %v795
    %1012 = vmatpush.bf16.msra.mxu0 %v792
    %1013 = vmatpush.bf16.msra.mxu0 %v789
    %1014 = vmatmul.bf16.gmra.mxu0 %v259
    %v1015 = vpop.f32.mrf.mxu0
    %v1016 = vadd.f32 %v1002, %v1015
    %v1017 = vpop.f32.mrf.mxu0
    %v1018 = vadd.f32 %v1004, %v1017
    %1019 = vdwg.mxu0
    %1020 = vmatpush.bf16.msra.mxu0 %v739
    %1021 = vmatpush.bf16.msra.mxu0 %v736
    %1022 = vmatpush.bf16.msra.mxu0 %v733
    %1023 = vmatpush.bf16.msra.mxu0 %v730
    %1024 = vmatpush.bf16.msra.mxu0 %v727
    %1025 = vmatpush.bf16.msra.mxu0 %v724
    %1026 = vmatpush.bf16.msra.mxu0 %v721
    %1027 = vmatpush.bf16.msra.mxu0 %v718
    %1028 = vmatmul.bf16.gmra.mxu0 %v256
    %v1029 = vpop.f32.mrf.mxu0
    %v1030 = vadd.f32 %v392, %v1029
    %v1031 = vpop.f32.mrf.mxu0
    %v1032 = vadd.f32 %v392, %v1031
    %1033 = vdwg.mxu0
    %1034 = vmatpush.bf16.msra.mxu0 %v763
    %1035 = vmatpush.bf16.msra.mxu0 %v760
    %1036 = vmatpush.bf16.msra.mxu0 %v757
    %1037 = vmatpush.bf16.msra.mxu0 %v754
    %1038 = vmatpush.bf16.msra.mxu0 %v751
    %1039 = vmatpush.bf16.msra.mxu0 %v748
    %1040 = vmatpush.bf16.msra.mxu0 %v745
    %1041 = vmatpush.bf16.msra.mxu0 %v742
    %1042 = vmatmul.bf16.gmra.mxu0 %v257
    %v1043 = vpop.f32.mrf.mxu0
    %v1044 = vadd.f32 %v1030, %v1043
    %v1045 = vpop.f32.mrf.mxu0
    %v1046 = vadd.f32 %v1032, %v1045
    %1047 = vdwg.mxu0
    %1048 = vmatpush.bf16.msra.mxu0 %v787
    %1049 = vmatpush.bf16.msra.mxu0 %v784
    %1050 = vmatpush.bf16.msra.mxu0 %v781
    %1051 = vmatpush.bf16.msra.mxu0 %v778
    %1052 = vmatpush.bf16.msra.mxu0 %v775
    %1053 = vmatpush.bf16.msra.mxu0 %v772
    %1054 = vmatpush.bf16.msra.mxu0 %v769
    %1055 = vmatpush.bf16.msra.mxu0 %v766
    %1056 = vmatmul.bf16.gmra.mxu0 %v258
    %v1057 = vpop.f32.mrf.mxu0
    %v1058 = vadd.f32 %v1044, %v1057
    %v1059 = vpop.f32.mrf.mxu0
    %v1060 = vadd.f32 %v1046, %v1059
    %1061 = vdwg.mxu0
    %1062 = vmatpush.bf16.msra.mxu0 %v811
    %1063 = vmatpush.bf16.msra.mxu0 %v808
    %1064 = vmatpush.bf16.msra.mxu0 %v805
    %1065 = vmatpush.bf16.msra.mxu0 %v802
    %1066 = vmatpush.bf16.msra.mxu0 %v799
    %1067 = vmatpush.bf16.msra.mxu0 %v796
    %1068 = vmatpush.bf16.msra.mxu0 %v793
    %1069 = vmatpush.bf16.msra.mxu0 %v790
    %1070 = vmatmul.bf16.gmra.mxu0 %v259
    %v1071 = vpop.f32.mrf.mxu0
    %v1072 = vadd.f32 %v1058, %v1071
    %v1073 = vpop.f32.mrf.mxu0
    %v1074 = vadd.f32 %v1060, %v1073
    %1075 = vdwg.mxu0
    %v1076 = vmax.f32 %v960, 0.0
    %v1077 = vmax.f32 %v1016, 0.0
    %v1078 = vmax.f32 %v1072, 0.0
    %v1079 = vmax.f32 %v962, 0.0
    %v1080 = vmax.f32 %v1018, 0.0
    %v1081 = vmax.f32 %v1074, 0.0
    %v1082 = vpack.c.bf16 %v1079, %v1076
    %v1083 = vpack.c.bf16 %v1080, %v1077
    %v1084 = vpack.c.bf16 %v1081, %v1078
    %v1085 = vld [vmem:[#allocation10] sm:$0xf]
    %v1086 = vld [vmem:[#allocation10 + $0x4] sm:$0xf]
    %v1087 = vld [vmem:[#allocation10 + $0x8] sm:$0xf]
    %v1088 = vld [vmem:[#allocation10 + $0xc] sm:$0xf]
    %v1089 = vld [vmem:[#allocation10 + $0x10] sm:$0xf]
    %v1090 = vld [vmem:[#allocation10 + $0x14] sm:$0xf]
    %v1091 = vld [vmem:[#allocation10 + $0x18] sm:$0xf]
    %v1092 = vld [vmem:[#allocation10 + $0x1c] sm:$0xf]
    %v1093 = vld [vmem:[#allocation10 + $0x20] sm:$0xf]
    %v1094 = vld [vmem:[#allocation10 + $0x24] sm:$0xf]
    %v1095 = vld [vmem:[#allocation10 + $0x28] sm:$0xf]
    %v1096 = vld [vmem:[#allocation10 + $0x2c] sm:$0xf]
    %v1097 = vld [vmem:[#allocation10 + $0x30] sm:$0xf]
    %v1098 = vld [vmem:[#allocation10 + $0x34] sm:$0xf]
    %v1099 = vld [vmem:[#allocation10 + $0x38] sm:$0xf]
    %v1100 = vld [vmem:[#allocation10 + $0x3c] sm:$0xf]
    %v1101 = vld [vmem:[#allocation10 + $0x40] sm:$0xf]
    %v1102 = vld [vmem:[#allocation10 + $0x44] sm:$0xf]
    %v1103 = vld [vmem:[#allocation10 + $0x48] sm:$0xf]
    %v1104 = vld [vmem:[#allocation10 + $0x4c] sm:$0xf]
    %v1105 = vld [vmem:[#allocation10 + $0x50] sm:$0xf]
    %v1106 = vld [vmem:[#allocation10 + $0x54] sm:$0xf]
    %v1107 = vld [vmem:[#allocation10 + $0x58] sm:$0xf]
    %v1108 = vld [vmem:[#allocation10 + $0x5c] sm:$0xf]
    %v1109 = vld [vmem:[#allocation10 + $0x60] sm:$0xf]
    %v1110 = vld [vmem:[#allocation10 + $0x64] sm:$0xf]
    %v1111 = vld [vmem:[#allocation10 + $0x68] sm:$0xf]
    %v1112 = vld [vmem:[#allocation10 + $0x6c] sm:$0xf]
    %v1113 = vld [vmem:[#allocation10 + $0x70] sm:$0xf]
    %v1114 = vld [vmem:[#allocation10 + $0x74] sm:$0xf]
    %v1115 = vld [vmem:[#allocation10 + $0x78] sm:$0xf]
    %v1116 = vld [vmem:[#allocation10 + $0x7c] sm:$0xf]
    %v1117 = vld [vmem:[#allocation10 + $0x80] sm:$0xf]
    %v1118 = vld [vmem:[#allocation10 + $0x84] sm:$0xf]
    %v1119 = vld [vmem:[#allocation10 + $0x88] sm:$0xf]
    %v1120 = vld [vmem:[#allocation10 + $0x8c] sm:$0xf]
    %v1121 = vld [vmem:[#allocation10 + $0x90] sm:$0xf]
    %v1122 = vld [vmem:[#allocation10 + $0x94] sm:$0xf]
    %v1123 = vld [vmem:[#allocation10 + $0x98] sm:$0xf]
    %v1124 = vld [vmem:[#allocation10 + $0x9c] sm:$0xf]
    %v1125 = vld [vmem:[#allocation10 + $0xa0] sm:$0xf]
    %v1126 = vld [vmem:[#allocation10 + $0xa4] sm:$0xf]
    %v1127 = vld [vmem:[#allocation10 + $0xa8] sm:$0xf]
    %v1128 = vld [vmem:[#allocation10 + $0xac] sm:$0xf]
    %v1129 = vld [vmem:[#allocation10 + $0xb0] sm:$0xf]
    %v1130 = vld [vmem:[#allocation10 + $0xb4] sm:$0xf]
    %v1131 = vld [vmem:[#allocation10 + $0xb8] sm:$0xf]
    %v1132 = vld [vmem:[#allocation10 + $0xbc] sm:$0xf]
    %v1133 = vld [vmem:[%s6] sm:$0x1]
    %v1135 = vperm.slane %v1133, 0
    %v1185 = vunpack.c.l.b16 %v1085
    %v1186 = vunpack.c.l.b16 %v1086
    %v1187 = vunpack.c.l.b16 %v1087
    %v1188 = vunpack.c.l.b16 %v1088
    %v1189 = vunpack.c.l.b16 %v1089
    %v1190 = vunpack.c.l.b16 %v1090
    %v1191 = vunpack.c.l.b16 %v1091
    %v1192 = vunpack.c.l.b16 %v1092
    %v1193 = vunpack.c.l.b16 %v1093
    %v1194 = vunpack.c.l.b16 %v1094
    %v1195 = vunpack.c.l.b16 %v1095
    %v1196 = vunpack.c.l.b16 %v1096
    %v1197 = vunpack.c.l.b16 %v1097
    %v1198 = vunpack.c.l.b16 %v1098
    %v1199 = vunpack.c.l.b16 %v1099
    %v1200 = vunpack.c.l.b16 %v1100
    %v1201 = vunpack.c.l.b16 %v1101
    %v1202 = vunpack.c.l.b16 %v1102
    %v1203 = vunpack.c.l.b16 %v1103
    %v1204 = vunpack.c.l.b16 %v1104
    %v1205 = vunpack.c.l.b16 %v1105
    %v1206 = vunpack.c.l.b16 %v1106
    %v1207 = vunpack.c.l.b16 %v1107
    %v1208 = vunpack.c.l.b16 %v1108
    %v1209 = vunpack.c.l.b16 %v1109
    %v1210 = vunpack.c.l.b16 %v1110
    %v1211 = vunpack.c.l.b16 %v1111
    %v1212 = vunpack.c.l.b16 %v1112
    %v1213 = vunpack.c.l.b16 %v1113
    %v1214 = vunpack.c.l.b16 %v1114
    %v1215 = vunpack.c.l.b16 %v1115
    %v1216 = vunpack.c.l.b16 %v1116
    %v1217 = vunpack.c.l.b16 %v1117
    %v1218 = vunpack.c.l.b16 %v1118
    %v1219 = vunpack.c.l.b16 %v1119
    %v1220 = vunpack.c.l.b16 %v1120
    %v1221 = vunpack.c.l.b16 %v1121
    %v1222 = vunpack.c.l.b16 %v1122
    %v1223 = vunpack.c.l.b16 %v1123
    %v1224 = vunpack.c.l.b16 %v1124
    %v1225 = vunpack.c.l.b16 %v1125
    %v1226 = vunpack.c.l.b16 %v1126
    %v1227 = vunpack.c.l.b16 %v1127
    %v1228 = vunpack.c.l.b16 %v1128
    %v1229 = vunpack.c.l.b16 %v1129
    %v1230 = vunpack.c.l.b16 %v1130
    %v1231 = vunpack.c.l.b16 %v1131
    %v1232 = vunpack.c.l.b16 %v1132
    %v1233 = vpack.c.b16 %v1186, %v1185
    %v1234 = vpack.c.b16 %v1188, %v1187
    %v1235 = vpack.c.b16 %v1190, %v1189
    %v1236 = vpack.c.b16 %v1192, %v1191
    %v1237 = vpack.c.b16 %v1194, %v1193
    %v1238 = vpack.c.b16 %v1196, %v1195
    %v1239 = vpack.c.b16 %v1198, %v1197
    %v1240 = vpack.c.b16 %v1200, %v1199
    %v1241 = vpack.c.b16 %v1202, %v1201
    %v1242 = vpack.c.b16 %v1204, %v1203
    %v1243 = vpack.c.b16 %v1206, %v1205
    %v1244 = vpack.c.b16 %v1208, %v1207
    %v1245 = vpack.c.b16 %v1210, %v1209
    %v1246 = vpack.c.b16 %v1212, %v1211
    %v1247 = vpack.c.b16 %v1214, %v1213
    %v1248 = vpack.c.b16 %v1216, %v1215
    %v1249 = vpack.c.b16 %v1218, %v1217
    %v1250 = vpack.c.b16 %v1220, %v1219
    %v1251 = vpack.c.b16 %v1222, %v1221
    %v1252 = vpack.c.b16 %v1224, %v1223
    %v1253 = vpack.c.b16 %v1226, %v1225
    %v1254 = vpack.c.b16 %v1228, %v1227
    %v1255 = vpack.c.b16 %v1230, %v1229
    %v1256 = vpack.c.b16 %v1232, %v1231
    %1281 = vmatpush.bf16.msra.mxu0 %v1240
    %1282 = vmatpush.bf16.msra.mxu0 %v1239
    %1283 = vmatpush.bf16.msra.mxu0 %v1238
    %1284 = vmatpush.bf16.msra.mxu0 %v1237
    %1285 = vmatpush.bf16.msra.mxu0 %v1236
    %1286 = vmatpush.bf16.msra.mxu0 %v1235
    %1287 = vmatpush.bf16.msra.mxu0 %v1234
    %1288 = vmatpush.bf16.msra.mxu0 %v1233
    %1289 = vmatmul.bf16.gmra.mxu0 %v1082
    %v1290 = vpop.f32.mrf.mxu0
    %v1291 = vadd.f32 %v1135, %v1290
    %v1292 = vpop.f32.mrf.mxu0
    %v1293 = vadd.f32 %v1135, %v1292
    %1294 = vdwg.mxu0
    %1295 = vmatpush.bf16.msra.mxu0 %v1248
    %1296 = vmatpush.bf16.msra.mxu0 %v1247
    %1297 = vmatpush.bf16.msra.mxu0 %v1246
    %1298 = vmatpush.bf16.msra.mxu0 %v1245
    %1299 = vmatpush.bf16.msra.mxu0 %v1244
    %1300 = vmatpush.bf16.msra.mxu0 %v1243
    %1301 = vmatpush.bf16.msra.mxu0 %v1242
    %1302 = vmatpush.bf16.msra.mxu0 %v1241
    %1303 = vmatmul.bf16.gmra.mxu0 %v1083
    %v1304 = vpop.f32.mrf.mxu0
    %v1305 = vadd.f32 %v1291, %v1304
    %v1306 = vpop.f32.mrf.mxu0
    %v1307 = vadd.f32 %v1293, %v1306
    %1308 = vdwg.mxu0
    %1309 = vmatpush.bf16.msra.mxu0 %v1256
    %1310 = vmatpush.bf16.msra.mxu0 %v1255
    %1311 = vmatpush.bf16.msra.mxu0 %v1254
    %1312 = vmatpush.bf16.msra.mxu0 %v1253
    %1313 = vmatpush.bf16.msra.mxu0 %v1252
    %1314 = vmatpush.bf16.msra.mxu0 %v1251
    %1315 = vmatpush.bf16.msra.mxu0 %v1250
    %1316 = vmatpush.bf16.msra.mxu0 %v1249
    %1317 = vmatmul.bf16.gmra.mxu0 %v1084
    %v1318 = vpop.f32.mrf.mxu0
    %v1319 = vadd.f32 %v1305, %v1318
    %v1320 = vpop.f32.mrf.mxu0
    %v1321 = vadd.f32 %v1307, %v1320
    %1322 = vdwg.mxu0
    %v1323 = vmax.f32 %v1319, 0.0
    %v1324 = vmax.f32 %v1321, 0.0
    %v1325 = vpack.c.bf16 %v1324, %v1323
    %v1326 = vld [vmem:[#allocation11] sm:$0xf]
    %v1327 = vld [vmem:[#allocation11 + $0x4] sm:$0xf]
    %v1328 = vld [vmem:[#allocation11 + $0x8] sm:$0xf]
    %v1329 = vld [vmem:[#allocation11 + $0xc] sm:$0xf]
    %v1330 = vld [vmem:[#allocation11 + $0x10] sm:$0xf]
    %v1331 = vld [vmem:[#allocation11 + $0x14] sm:$0xf]
    %v1332 = vld [vmem:[#allocation11 + $0x18] sm:$0xf]
    %v1333 = vld [vmem:[#allocation11 + $0x1c] sm:$0xf]
    %v1334 = vld [vmem:[#allocation11 + $0x20] sm:$0xf]
    %v1335 = vld [vmem:[#allocation11 + $0x24] sm:$0xf]
    %v1336 = vld [vmem:[#allocation11 + $0x28] sm:$0xf]
    %v1337 = vld [vmem:[#allocation11 + $0x2c] sm:$0xf]
    %v1338 = vld [vmem:[#allocation11 + $0x30] sm:$0xf]
    %v1339 = vld [vmem:[#allocation11 + $0x34] sm:$0xf]
    %v1340 = vld [vmem:[#allocation11 + $0x38] sm:$0xf]
    %v1341 = vld [vmem:[#allocation11 + $0x3c] sm:$0xf]
    %v1342 = vld [vmem:[%s8] sm:$0x1]
    %v1344 = vperm.slane %v1342, 0
    %v1362 = vunpack.c.l.b16 %v1326
    %v1363 = vunpack.c.l.b16 %v1327
    %v1364 = vunpack.c.l.b16 %v1328
    %v1365 = vunpack.c.l.b16 %v1329
    %v1366 = vunpack.c.l.b16 %v1330
    %v1367 = vunpack.c.l.b16 %v1331
    %v1368 = vunpack.c.l.b16 %v1332
    %v1369 = vunpack.c.l.b16 %v1333
    %v1370 = vunpack.c.l.b16 %v1334
    %v1371 = vunpack.c.l.b16 %v1335
    %v1372 = vunpack.c.l.b16 %v1336
    %v1373 = vunpack.c.l.b16 %v1337
    %v1374 = vunpack.c.l.b16 %v1338
    %v1375 = vunpack.c.l.b16 %v1339
    %v1376 = vunpack.c.l.b16 %v1340
    %v1377 = vunpack.c.l.b16 %v1341
    %v1378 = vpack.c.b16 %v1363, %v1362
    %v1379 = vpack.c.b16 %v1365, %v1364
    %v1380 = vpack.c.b16 %v1367, %v1366
    %v1381 = vpack.c.b16 %v1369, %v1368
    %v1382 = vpack.c.b16 %v1371, %v1370
    %v1383 = vpack.c.b16 %v1373, %v1372
    %v1384 = vpack.c.b16 %v1375, %v1374
    %v1385 = vpack.c.b16 %v1377, %v1376
    %1394 = vmatpush.bf16.msra.mxu0 %v1385
    %1395 = vmatpush.bf16.msra.mxu0 %v1384
    %1396 = vmatpush.bf16.msra.mxu0 %v1383
    %1397 = vmatpush.bf16.msra.mxu0 %v1382
    %1398 = vmatpush.bf16.msra.mxu0 %v1381
    %1399 = vmatpush.bf16.msra.mxu0 %v1380
    %1400 = vmatpush.bf16.msra.mxu0 %v1379
    %1401 = vmatpush.bf16.msra.mxu0 %v1378
    %1402 = vmatmul.bf16.gmra.mxu0 %v1325
    %v1403 = vpop.f32.mrf.mxu0
    %v1404 = vadd.f32 %v1344, %v1403
    %v1405 = vpop.f32.mrf.mxu0
    %v1406 = vadd.f32 %v1344, %v1405
    %1407 = vdwg.mxu0
    %v1408 = vmax.f32 %v1404, 0.0
    %v1409 = vmax.f32 %v1406, 0.0
    %v1410 = vpack.c.bf16 %v1409, %v1408
    %v1411 = vld [vmem:[#allocation13] sm:$0xf]
    %v1412 = vld [vmem:[#allocation13 + $0x4] sm:$0xf]
    %v1413 = vld [vmem:[#allocation13 + $0x8] sm:$0xf]
    %v1414 = vld [vmem:[#allocation13 + $0xc] sm:$0xf]
    %v1415 = vld [vmem:[#allocation13 + $0x10] sm:$0xf]
    %v1416 = vld [vmem:[#allocation13 + $0x14] sm:$0xf]
    %v1417 = vld [vmem:[#allocation13 + $0x18] sm:$0xf]
    %v1418 = vld [vmem:[#allocation13 + $0x1c] sm:$0xf]
    %v1419 = vld [vmem:[#allocation13 + $0x20] sm:$0xf]
    %v1420 = vld [vmem:[#allocation13 + $0x24] sm:$0xf]
    %v1421 = vld [vmem:[#allocation13 + $0x28] sm:$0xf]
    %v1422 = vld [vmem:[#allocation13 + $0x2c] sm:$0xf]
    %v1423 = vld [vmem:[#allocation13 + $0x30] sm:$0xf]
    %v1424 = vld [vmem:[#allocation13 + $0x34] sm:$0xf]
    %v1425 = vld [vmem:[#allocation13 + $0x38] sm:$0xf]
    %v1426 = vld [vmem:[#allocation13 + $0x3c] sm:$0xf]
    %v1427 = vld [vmem:[%s10] sm:$0x1]
    %v1429 = vperm.slane %v1427, 0
    %v1447 = vunpack.c.l.b16 %v1411
    %v1448 = vunpack.c.l.b16 %v1412
    %v1449 = vunpack.c.l.b16 %v1413
    %v1450 = vunpack.c.l.b16 %v1414
    %v1451 = vunpack.c.l.b16 %v1415
    %v1452 = vunpack.c.l.b16 %v1416
    %v1453 = vunpack.c.l.b16 %v1417
    %v1454 = vunpack.c.l.b16 %v1418
    %v1455 = vunpack.c.l.b16 %v1419
    %v1456 = vunpack.c.l.b16 %v1420
    %v1457 = vunpack.c.l.b16 %v1421
    %v1458 = vunpack.c.l.b16 %v1422
    %v1459 = vunpack.c.l.b16 %v1423
    %v1460 = vunpack.c.l.b16 %v1424
    %v1461 = vunpack.c.l.b16 %v1425
    %v1462 = vunpack.c.l.b16 %v1426
    %v1463 = vpack.c.b16 %v1448, %v1447
    %v1464 = vpack.c.b16 %v1450, %v1449
    %v1465 = vpack.c.b16 %v1452, %v1451
    %v1466 = vpack.c.b16 %v1454, %v1453
    %v1467 = vpack.c.b16 %v1456, %v1455
    %v1468 = vpack.c.b16 %v1458, %v1457
    %v1469 = vpack.c.b16 %v1460, %v1459
    %v1470 = vpack.c.b16 %v1462, %v1461
    %1479 = vmatpush.bf16.msra.mxu0 %v1470
    %1480 = vmatpush.bf16.msra.mxu0 %v1469
    %1481 = vmatpush.bf16.msra.mxu0 %v1468
    %1482 = vmatpush.bf16.msra.mxu0 %v1467
    %1483 = vmatpush.bf16.msra.mxu0 %v1466
    %1484 = vmatpush.bf16.msra.mxu0 %v1465
    %1485 = vmatpush.bf16.msra.mxu0 %v1464
    %1486 = vmatpush.bf16.msra.mxu0 %v1463
    %1487 = vmatmul.bf16.gmra.mxu0 %v1410
    %v1488 = vpop.f32.mrf.mxu0
    %v1489 = vadd.f32 %v1429, %v1488
    %v1490 = vpop.f32.mrf.mxu0
    %v1491 = vadd.f32 %v1429, %v1490
    %1492 = vdwg.mxu0
    %v1493 = vpack.c.bf16 %v1489, %v1489
    %v1494 = vpack.c.bf16 %v1491, %v1491
    %1495 = vst [vmem:[#allocation14] sm:$0xf] %v1493
    %1496 = vst [vmem:[#allocation14 + $0x4] sm:$0xf] %v1494
    // Predicated region
    $region74: #{tpu_custom_call.1} parent=1 // pred_check
      _
    $region75: #{tpu_custom_call.1} parent=1 // pred_check_branch
      %1498 = sbr.rel (0) target = $region77
    $region76: #{tpu_custom_call.1} parent=1 // pred_region
      %1500 = vsyncadd [#allocation4], 0
      %s1501 = sshll.u32 [#allocation14], 4
      %s1502 = int_to_ptr.vmem [resolvable:$true] %s1501
      %s1503 = sshll.u32 %s11, 4
      %s1504 = int_to_ptr.hbm [resolvable:$true] %s1503
      %1509 = dma.vmem_to_hbm [thread:$0]  %s1502, 128, %s1504, [#allocation4], 64, 64, 4
    $region77: #{tpu_custom_call.1} parent=1 // pred_fallthru
      _
    // Predicated region
    $region78: #{tpu_custom_call.1} parent=1 // pred_check
      _
    $region79: #{tpu_custom_call.1} parent=1 // pred_check_branch
      %1511 = sbr.rel (0) target = $region81
    $region80: #{tpu_custom_call.1} parent=1 // pred_region
      %1513 = dma.done [#allocation4], 128
    $region81: #{tpu_custom_call.1} parent=1 // pred_fallthru
      _
    %1514 = vsyncpa [#allocation3], 1
    %1515 = vsyncpa [#allocation6], 1
    %1516 = vsyncpa [#allocation9], 1
    %1517 = vsyncpa [#allocation12], 1
    %1518 = vsyncpa [#allocation4], 1

// kernel: tpu_custom_call.1
$region0: #{tpu_custom_call.1}
  #allocation0 [shape = 'u32[]', space=smem, size = 0x4, offset = 0x4, fixed_abs, tag = 'smem constant byte address 0x4 - core index']
  #allocation1 [shape = 'u32[72,128]{1,0:T(1,128)}', space=vmem, size = 0x9000, scoped, tag = 'internal scratch']
  %s0 = inlined_call_operand.hbm [shape: bf16[16,16], index: 0, kind: input, shape index: {}]
  %s1 = inlined_call_operand.hbm [shape: bf16[16,512], index: 1, kind: input, shape index: {}]
  %s2 = inlined_call_operand.hbm [shape: f32[1,512], index: 2, kind: input, shape index: {}]
  %s3 = inlined_call_operand.hbm [shape: bf16[512,384], index: 3, kind: input, shape index: {}]
  %s4 = inlined_call_operand.vmem [shape: f32[1,384], index: 4, kind: input, shape index: {}]
  %s5 = inlined_call_operand.hbm [shape: bf16[384,128], index: 5, kind: input, shape index: {}]
  %s6 = inlined_call_operand.vmem [shape: f32[1,128], index: 6, kind: input, shape index: {}]
  %s7 = inlined_call_operand.hbm [shape: bf16[128,128], index: 7, kind: input, shape index: {}]
  %s8 = inlined_call_operand.vmem [shape: f32[1,128], index: 8, kind: input, shape index: {}]
  %s9 = inlined_call_operand.hbm [shape: bf16[128,128], index: 9, kind: input, shape index: {}]
  %s10 = inlined_call_operand.vmem [shape: f32[1,128], index: 10, kind: input, shape index: {}]
  %s11 = inlined_call_operand.hbm [shape: bf16[16,128], index: 11, kind: output, shape index: {}]
  %s12 = sld [smem:[#allocation0]]
  $region82: #{tpu_custom_call.1} parent=0
    _
  %s14 = ssub.s32 1, %s12
  %s15 = scalar_select 0, %s14, %s12
  $region1: #{tpu_custom_call.1} parent=0
    #allocation2 [shape = 'u8[4096]{0}', space=vmem, size = 0x1000, scoped, tag = 'input window, operand 0, single buffered']
    #allocation3 [shape = 's32[1]{0}', space=sflag, size = 0x4, scoped, tag = 'scoped memory for tpu_custom_call.1']
    #allocation4 [shape = 's32[1]{0}', space=sflag, size = 0x4, scoped, tag = 'scoped memory for tpu_custom_call.1']
    #allocation5 [shape = 'u8[16384]{0}', space=vmem, size = 0x4000, scoped, tag = 'input window, operand 1, single buffered']
    #allocation6 [shape = 's32[1]{0}', space=sflag, size = 0x4, scoped, tag = 'scoped memory for tpu_custom_call.1']
    #allocation7 [shape = 'u8[2048]{0}', space=vmem, size = 0x800, scoped, tag = 'input window, operand 2, single buffered']
    #allocation8 [shape = 'u8[393216]{0}', space=vmem, size = 0x60000, scoped, tag = 'input window, operand 3, single buffered']
    #allocation9 [shape = 's32[1]{0}', space=sflag, size = 0x4, scoped, tag = 'scoped memory for tpu_custom_call.1']
    #allocation10 [shape = 'u8[98304]{0}', space=vmem, size = 0x18000, scoped, tag = 'input window, operand 5, single buffered']
    #allocation11 [shape = 'u8[32768]{0}', space=vmem, size = 0x8000, scoped, tag = 'input window, operand 7, single buffered']
    #allocation12 [shape = 's32[1]{0}', space=sflag, size = 0x4, scoped, tag = 'scoped memory for tpu_custom_call.1']
    #allocation13 [shape = 'u8[32768]{0}', space=vmem, size = 0x8000, scoped, tag = 'input window, operand 9, single buffered']
    #allocation14 [shape = 'u8[4096]{0}', space=vmem, size = 0x1000, scoped, tag = 'output window, operand 0, single buffered']
    %16 = vsyncpa [#allocation3], 0
    %17 = vsyncpa [#allocation6], 0
    %18 = vsyncpa [#allocation9], 0
    %19 = vsyncpa [#allocation12], 0
    %20 = vsyncpa [#allocation4], 0
    // Predicated region
    $region2: #{tpu_custom_call.1} parent=1 // pred_check
      _
    $region3: #{tpu_custom_call.1} parent=1 // pred_check_branch
      %22 = sbr.rel (0) target = $region5
    $region4: #{tpu_custom_call.1} parent=1 // pred_region
      %24 = vsyncadd [#allocation3], 0
      %s25 = sshll.u32 %s0, 4
      %s26 = int_to_ptr.hbm [resolvable:$true] %s25
      %s27 = sshll.u32 [#allocation2], 4
      %s28 = int_to_ptr.vmem [resolvable:$true] %s27
      %33 = dma.hbm_to_vmem [thread:$0]  %s26, 128, %s28, [#allocation3], 64, 64, 4
    $region5: #{tpu_custom_call.1} parent=1 // pred_fallthru
      _
    // Predicated region
    $region6: #{tpu_custom_call.1} parent=1 // pred_check
      _
    $region7: #{tpu_custom_call.1} parent=1 // pred_check_branch
      %35 = sbr.rel (0) target = $region9
    $region8: #{tpu_custom_call.1} parent=1 // pred_region
      %37 = vsyncadd [#allocation6], 0
      %s38 = sshll.u32 %s1, 4
      %s39 = int_to_ptr.hbm [resolvable:$true] %s38
      %s40 = sshll.u32 [#allocation5], 4
      %s41 = int_to_ptr.vmem [resolvable:$true] %s40
      %46 = dma.hbm_to_vmem [thread:$0]  %s39, 512, %s41, [#allocation6], 256, 256, 16
    $region9: #{tpu_custom_call.1} parent=1 // pred_fallthru
      _
    // Predicated region
    $region10: #{tpu_custom_call.1} parent=1 // pred_check
      _
    $region11: #{tpu_custom_call.1} parent=1 // pred_check_branch
      %48 = sbr.rel (0) target = $region13
    $region12: #{tpu_custom_call.1} parent=1 // pred_region
      %50 = vsyncadd [#allocation6], 0
      %s52 = sshll.u32 %s2, 4
      %s53 = int_to_ptr.hbm [resolvable:$true] %s52
      %s54 = sshll.u32 [#allocation7], 4
      %s55 = int_to_ptr.vmem [resolvable:$true] %s54
      %57 = dma.hbm_to_vmem [thread:$0]  %s53, 64, %s55, [#allocation6]
    $region13: #{tpu_custom_call.1} parent=1 // pred_fallthru
      _
    // Predicated region
    $region14: #{tpu_custom_call.1} parent=1 // pred_check
      _
    $region15: #{tpu_custom_call.1} parent=1 // pred_check_branch
      %59 = sbr.rel (0) target = $region17
    $region16: #{tpu_custom_call.1} parent=1 // pred_region
      %61 = vsyncadd [#allocation9], 0
      %s62 = sshll.u32 %s3, 4
      %s63 = int_to_ptr.hbm [resolvable:$true] %s62
      %s64 = sshll.u32 [#allocation8], 4
      %s65 = int_to_ptr.vmem [resolvable:$true] %s64
      %70 = dma.hbm_to_vmem [thread:$0]  %s63, 12288, %s65, [#allocation9], 192, 192, 12
    $region17: #{tpu_custom_call.1} parent=1 // pred_fallthru
      _
    // Predicated region
    $region18: #{tpu_custom_call.1} parent=1 // pred_check
      _
    $region19: #{tpu_custom_call.1} parent=1 // pred_check_branch
      %72 = sbr.rel (0) target = $region21
    $region20: #{tpu_custom_call.1} parent=1 // pred_region
      _
    $region21: #{tpu_custom_call.1} parent=1 // pred_fallthru
      _
    // Predicated region
    $region22: #{tpu_custom_call.1} parent=1 // pred_check
      _
    $region23: #{tpu_custom_call.1} parent=1 // pred_check_branch
      %74 = sbr.rel (0) target = $region25
    $region24: #{tpu_custom_call.1} parent=1 // pred_region
      %76 = vsyncadd [#allocation9], 0
      %s77 = sshll.u32 %s5, 4
      %s78 = int_to_ptr.hbm [resolvable:$true] %s77
      %s79 = sshll.u32 [#allocation10], 4
      %s80 = int_to_ptr.vmem [resolvable:$true] %s79
      %85 = dma.hbm_to_vmem [thread:$0]  %s78, 3072, %s80, [#allocation9], 64, 64, 4
    $region25: #{tpu_custom_call.1} parent=1 // pred_fallthru
      _
    // Predicated region
    $region26: #{tpu_custom_call.1} parent=1 // pred_check
      _
    $region27: #{tpu_custom_call.1} parent=1 // pred_check_branch
      %87 = sbr.rel (0) target = $region29
    $region28: #{tpu_custom_call.1} parent=1 // pred_region
      _
    $region29: #{tpu_custom_call.1} parent=1 // pred_fallthru
      _
    // Predicated region
    $region30: #{tpu_custom_call.1} parent=1 // pred_check
      _
    $region31: #{tpu_custom_call.1} parent=1 // pred_check_branch
      %89 = sbr.rel (0) target = $region33
    $region32: #{tpu_custom_call.1} parent=1 // pred_region
      %91 = vsyncadd [#allocation12], 0
      %s92 = sshll.u32 %s7, 4
      %s93 = int_to_ptr.hbm [resolvable:$true] %s92
      %s94 = sshll.u32 [#allocation11], 4
      %s95 = int_to_ptr.vmem [resolvable:$true] %s94
      %100 = dma.hbm_to_vmem [thread:$0]  %s93, 1024, %s95, [#allocation12], 64, 64, 4
    $region33: #{tpu_custom_call.1} parent=1 // pred_fallthru
      _
    // Predicated region
    $region34: #{tpu_custom_call.1} parent=1 // pred_check
      _
    $region35: #{tpu_custom_call.1} parent=1 // pred_check_branch
      %102 = sbr.rel (0) target = $region37
    $region36: #{tpu_custom_call.1} parent=1 // pred_region
      _
    $region37: #{tpu_custom_call.1} parent=1 // pred_fallthru
      _
    // Predicated region
    $region38: #{tpu_custom_call.1} parent=1 // pred_check
      _
    $region39: #{tpu_custom_call.1} parent=1 // pred_check_branch
      %104 = sbr.rel (0) target = $region41
    $region40: #{tpu_custom_call.1} parent=1 // pred_region
      %106 = vsyncadd [#allocation12], 0
      %s107 = sshll.u32 %s9, 4
      %s108 = int_to_ptr.hbm [resolvable:$true] %s107
      %s109 = sshll.u32 [#allocation13], 4
      %s110 = int_to_ptr.vmem [resolvable:$true] %s109
      %115 = dma.hbm_to_vmem [thread:$0]  %s108, 1024, %s110, [#allocation12], 64, 64, 4
    $region41: #{tpu_custom_call.1} parent=1 // pred_fallthru
      _
    // Predicated region
    $region42: #{tpu_custom_call.1} parent=1 // pred_check
      _
    $region43: #{tpu_custom_call.1} parent=1 // pred_check_branch
      %117 = sbr.rel (0) target = $region45
    $region44: #{tpu_custom_call.1} parent=1 // pred_region
      _
    $region45: #{tpu_custom_call.1} parent=1 // pred_fallthru
      _
    // Predicated region
    $region46: #{tpu_custom_call.1} parent=1 // pred_check
      _
    $region47: #{tpu_custom_call.1} parent=1 // pred_check_branch
      %119 = sbr.rel (0) target = $region49
    $region48: #{tpu_custom_call.1} parent=1 // pred_region
      %121 = dma.done [#allocation3], 128
    $region49: #{tpu_custom_call.1} parent=1 // pred_fallthru
      _
    // Predicated region
    $region50: #{tpu_custom_call.1} parent=1 // pred_check
      _
    $region51: #{tpu_custom_call.1} parent=1 // pred_check_branch
      %123 = sbr.rel (0) target = $region53
    $region52: #{tpu_custom_call.1} parent=1 // pred_region
      %125 = dma.done [#allocation6], 512
    $region53: #{tpu_custom_call.1} parent=1 // pred_fallthru
      _
    // Predicated region
    $region54: #{tpu_custom_call.1} parent=1 // pred_check
      _
    $region55: #{tpu_custom_call.1} parent=1 // pred_check_branch
      %127 = sbr.rel (0) target = $region57
    $region56: #{tpu_custom_call.1} parent=1 // pred_region
      %129 = dma.done [#allocation6], 64
    $region57: #{tpu_custom_call.1} parent=1 // pred_fallthru
      _
    // Predicated region
    $region58: #{tpu_custom_call.1} parent=1 // pred_check
      _
    $region59: #{tpu_custom_call.1} parent=1 // pred_check_branch
      %131 = sbr.rel (0) target = $region61
    $region60: #{tpu_custom_call.1} parent=1 // pred_region
      %133 = dma.done [#allocation9], 12288
    $region61: #{tpu_custom_call.1} parent=1 // pred_fallthru
      _
    // Predicated region
    $region62: #{tpu_custom_call.1} parent=1 // pred_check
      _
    $region63: #{tpu_custom_call.1} parent=1 // pred_check_branch
      %135 = sbr.rel (0) target = $region65
    $region64: #{tpu_custom_call.1} parent=1 // pred_region
      %137 = dma.done [#allocation9], 3072
    $region65: #{tpu_custom_call.1} parent=1 // pred_fallthru
      _
    // Predicated region
    $region66: #{tpu_custom_call.1} parent=1 // pred_check
      _
    $region67: #{tpu_custom_call.1} parent=1 // pred_check_branch
      %139 = sbr.rel (0) target = $region69
    $region68: #{tpu_custom_call.1} parent=1 // pred_region
      %141 = dma.done [#allocation12], 1024
    $region69: #{tpu_custom_call.1} parent=1 // pred_fallthru
      _
    // Predicated region
    $region70: #{tpu_custom_call.1} parent=1 // pred_check
      _
    $region71: #{tpu_custom_call.1} parent=1 // pred_check_branch
      %143 = sbr.rel (0) target = $region73
    $region72: #{tpu_custom_call.1} parent=1 // pred_region
      %145 = dma.done [#allocation12], 1024
    $region73: #{tpu_custom_call.1} parent=1 // pred_fallthru
      _
    %v147 = vld [vmem:[#allocation2] sm:$0xf]
    %v148 = vld [vmem:[#allocation2 + $0x4] sm:$0xf]
    %v149 = vld [vmem:[#allocation5] sm:$0xff]
    %v150 = vld [vmem:[#allocation5 + $0x8] sm:$0xff]
    %v151 = vld [vmem:[#allocation5 + $0x10] sm:$0xff]
    %v152 = vld [vmem:[#allocation5 + $0x18] sm:$0xff]
    %v153 = vld [vmem:[#allocation7] sm:$0xf]
    %v155 = vperm.slane %v153, 0
    %v156 = vperm.slane %v153, 1
    %v157 = vperm.slane %v153, 2
    %v158 = vperm.slane %v153, 3
    %v165 = vunpack.c.l.b16 %v147
    %v166 = vunpack.c.l.b16 %v148
    %v167 = vpack.c.b16 %v166, %v165
    %v172 = vunpack.c.l.b16 %v149
    %v173 = vunpack.c.h.b16 %v149
    %v174 = vunpack.c.l.b16 %v150
    %v175 = vunpack.c.h.b16 %v150
    %v176 = vunpack.c.l.b16 %v151
    %v177 = vunpack.c.h.b16 %v151
    %v178 = vunpack.c.l.b16 %v152
    %v179 = vunpack.c.h.b16 %v152
    %v180 = vpack.c.b16 %v176, %v172
    %v181 = vpack.c.b16 %v177, %v173
    %v182 = vpack.c.b16 %v178, %v174
    %v183 = vpack.c.b16 %v179, %v175
    %vm188 = vcmask 130048
    %v190 = vsel %vm188, %v167, 0
    %192 = vmatpush.bf16.msra.mxu0 0
    %193 = vmatpush.bf16.msra.mxu0 0
    %194 = vmatpush.bf16.msra.mxu0 0
    %195 = vmatpush.bf16.msra.mxu0 0
    %196 = vmatpush.bf16.msra.mxu0 0
    %197 = vmatpush.bf16.msra.mxu0 0
    %198 = vmatpush.bf16.msra.mxu0 0
    %199 = vmatpush.bf16.msra.mxu0 %v180
    %200 = vmatmul.bf16.gmra.mxu0 %v190
    %v201 = vpop.f32.mrf.mxu0
    %v202 = vadd.f32 %v155, %v201
    %v203 = vpop.f32.mrf.mxu0
    %v204 = vadd.f32 %v155, %v203
    %205 = vdwg.mxu0
    %206 = vmatpush.bf16.msra.mxu0 0
    %207 = vmatpush.bf16.msra.mxu0 0
    %208 = vmatpush.bf16.msra.mxu0 0
    %209 = vmatpush.bf16.msra.mxu0 0
    %210 = vmatpush.bf16.msra.mxu0 0
    %211 = vmatpush.bf16.msra.mxu0 0
    %212 = vmatpush.bf16.msra.mxu0 0
    %213 = vmatpush.bf16.msra.mxu0 %v181
    %214 = vmatmul.bf16.gmra.mxu0 %v190
    %v215 = vpop.f32.mrf.mxu0
    %v216 = vadd.f32 %v156, %v215
    %v217 = vpop.f32.mrf.mxu0
    %v218 = vadd.f32 %v156, %v217
    %219 = vdwg.mxu0
    %220 = vmatpush.bf16.msra.mxu0 0
    %221 = vmatpush.bf16.msra.mxu0 0
    %222 = vmatpush.bf16.msra.mxu0 0
    %223 = vmatpush.bf16.msra.mxu0 0
    %224 = vmatpush.bf16.msra.mxu0 0
    %225 = vmatpush.bf16.msra.mxu0 0
    %226 = vmatpush.bf16.msra.mxu0 0
    %227 = vmatpush.bf16.msra.mxu0 %v182
    %228 = vmatmul.bf16.gmra.mxu0 %v190
    %v229 = vpop.f32.mrf.mxu0
    %v230 = vadd.f32 %v157, %v229
    %v231 = vpop.f32.mrf.mxu0
    %v232 = vadd.f32 %v157, %v231
    %233 = vdwg.mxu0
    %234 = vmatpush.bf16.msra.mxu0 0
    %235 = vmatpush.bf16.msra.mxu0 0
    %236 = vmatpush.bf16.msra.mxu0 0
    %237 = vmatpush.bf16.msra.mxu0 0
    %238 = vmatpush.bf16.msra.mxu0 0
    %239 = vmatpush.bf16.msra.mxu0 0
    %240 = vmatpush.bf16.msra.mxu0 0
    %241 = vmatpush.bf16.msra.mxu0 %v183
    %242 = vmatmul.bf16.gmra.mxu0 %v190
    %v243 = vpop.f32.mrf.mxu0
    %v244 = vadd.f32 %v158, %v243
    %v245 = vpop.f32.mrf.mxu0
    %v246 = vadd.f32 %v158, %v245
    %247 = vdwg.mxu0
    %v248 = vmax.f32 %v202, 0.0
    %v249 = vmax.f32 %v216, 0.0
    %v250 = vmax.f32 %v230, 0.0
    %v251 = vmax.f32 %v244, 0.0
    %v252 = vmax.f32 %v204, 0.0
    %v253 = vmax.f32 %v218, 0.0
    %v254 = vmax.f32 %v232, 0.0
    %v255 = vmax.f32 %v246, 0.0
    %v256 = vpack.c.bf16 %v252, %v248
    %v257 = vpack.c.bf16 %v253, %v249
    %v258 = vpack.c.bf16 %v254, %v250
    %v259 = vpack.c.bf16 %v255, %v251
    %v260 = vld [vmem:[#allocation8] sm:$0xff]
    %v261 = vld [vmem:[#allocation8 + $0x8] sm:$0xf]
    %v262 = vld [vmem:[#allocation8 + $0xc] sm:$0xff]
    %v263 = vld [vmem:[#allocation8 + $0x14] sm:$0xf]
    %v264 = vld [vmem:[#allocation8 + $0x18] sm:$0xff]
    %v265 = vld [vmem:[#allocation8 + $0x20] sm:$0xf]
    %v266 = vld [vmem:[#allocation8 + $0x24] sm:$0xff]
    %v267 = vld [vmem:[#allocation8 + $0x2c] sm:$0xf]
    %v268 = vld [vmem:[#allocation8 + $0x30] sm:$0xff]
    %v269 = vld [vmem:[#allocation8 + $0x38] sm:$0xf]
    %v270 = vld [vmem:[#allocation8 + $0x3c] sm:$0xff]
    %v271 = vld [vmem:[#allocation8 + $0x44] sm:$0xf]
    %v272 = vld [vmem:[#allocation8 + $0x48] sm:$0xff]
    %v273 = vld [vmem:[#allocation8 + $0x50] sm:$0xf]
    %v274 = vld [vmem:[#allocation8 + $0x54] sm:$0xff]
    %v275 = vld [vmem:[#allocation8 + $0x5c] sm:$0xf]
    %v276 = vld [vmem:[#allocation8 + $0x60] sm:$0xff]
    %v277 = vld [vmem:[#allocation8 + $0x68] sm:$0xf]
    %v278 = vld [vmem:[#allocation8 + $0x6c] sm:$0xff]
    %v279 = vld [vmem:[#allocation8 + $0x74] sm:$0xf]
    %v280 = vld [vmem:[#allocation8 + $0x78] sm:$0xff]
    %v281 = vld [vmem:[#allocation8 + $0x80] sm:$0xf]
    %v282 = vld [vmem:[#allocation8 + $0x84] sm:$0xff]
    %v283 = vld [vmem:[#allocation8 + $0x8c] sm:$0xf]
    %v284 = vld [vmem:[#allocation8 + $0x90] sm:$0xff]
    %v285 = vld [vmem:[#allocation8 + $0x98] sm:$0xf]
    %v286 = vld [vmem:[#allocation8 + $0x9c] sm:$0xff]
    %v287 = vld [vmem:[#allocation8 + $0xa4] sm:$0xf]
    %v288 = vld [vmem:[#allocation8 + $0xa8] sm:$0xff]
    %v289 = vld [vmem:[#allocation8 + $0xb0] sm:$0xf]
    %v290 = vld [vmem:[#allocation8 + $0xb4] sm:$0xff]
    %v291 = vld [vmem:[#allocation8 + $0xbc] sm:$0xf]
    %v292 = vld [vmem:[#allocation8 + $0xc0] sm:$0xff]
    %v293 = vld [vmem:[#allocation8 + $0xc8] sm:$0xf]
    %v294 = vld [vmem:[#allocation8 + $0xcc] sm:$0xff]
    %v295 = vld [vmem:[#allocation8 + $0xd4] sm:$0xf]
    %v296 = vld [vmem:[#allocation8 + $0xd8] sm:$0xff]
    %v297 = vld [vmem:[#allocation8 + $0xe0] sm:$0xf]
    %v298 = vld [vmem:[#allocation8 + $0xe4] sm:$0xff]
    %v299 = vld [vmem:[#allocation8 + $0xec] sm:$0xf]
    %v300 = vld [vmem:[#allocation8 + $0xf0] sm:$0xff]
    %v301 = vld [vmem:[#allocation8 + $0xf8] sm:$0xf]
    %v302 = vld [vmem:[#allocation8 + $0xfc] sm:$0xff]
    %v303 = vld [vmem:[#allocation8 + $0x104] sm:$0xf]
    %v304 = vld [vmem:[#allocation8 + $0x108] sm:$0xff]
    %v305 = vld [vmem:[#allocation8 + $0x110] sm:$0xf]
    %v306 = vld [vmem:[#allocation8 + $0x114] sm:$0xff]
    %v307 = vld [vmem:[#allocation8 + $0x11c] sm:$0xf]
    %v308 = vld [vmem:[#allocation8 + $0x120] sm:$0xff]
    %v309 = vld [vmem:[#allocation8 + $0x128] sm:$0xf]
    %v310 = vld [vmem:[#allocation8 + $0x12c] sm:$0xff]
    %v311 = vld [vmem:[#allocation8 + $0x134] sm:$0xf]
    %v312 = vld [vmem:[#allocation8 + $0x138] sm:$0xff]
    %v313 = vld [vmem:[#allocation8 + $0x140] sm:$0xf]
    %v314 = vld [vmem:[#allocation8 + $0x144] sm:$0xff]
    %v315 = vld [vmem:[#allocation8 + $0x14c] sm:$0xf]
    %v316 = vld [vmem:[#allocation8 + $0x150] sm:$0xff]
    %v317 = vld [vmem:[#allocation8 + $0x158] sm:$0xf]
    %v318 = vld [vmem:[#allocation8 + $0x15c] sm:$0xff]
    %v319 = vld [vmem:[#allocation8 + $0x164] sm:$0xf]
    %v320 = vld [vmem:[#allocation8 + $0x168] sm:$0xff]
    %v321 = vld [vmem:[#allocation8 + $0x170] sm:$0xf]
    %v322 = vld [vmem:[#allocation8 + $0x174] sm:$0xff]
    %v323 = vld [vmem:[#allocation8 + $0x17c] sm:$0xf]
    %v324 = vld [vmem:[#allocation8 + $0x180] sm:$0xff]
    %v325 = vld [vmem:[#allocation8 + $0x188] sm:$0xf]
    %v326 = vld [vmem:[#allocation8 + $0x18c] sm:$0xff]
    %v327 = vld [vmem:[#allocation8 + $0x194] sm:$0xf]
    %v328 = vld [vmem:[#allocation8 + $0x198] sm:$0xff]
    %v329 = vld [vmem:[#allocation8 + $0x1a0] sm:$0xf]
    %v330 = vld [vmem:[#allocation8 + $0x1a4] sm:$0xff]
    %v331 = vld [vmem:[#allocation8 + $0x1ac] sm:$0xf]
    %v332 = vld [vmem:[#allocation8 + $0x1b0] sm:$0xff]
    %v333 = vld [vmem:[#allocation8 + $0x1b8] sm:$0xf]
    %v334 = vld [vmem:[#allocation8 + $0x1bc] sm:$0xff]
    %v335 = vld [vmem:[#allocation8 + $0x1c4] sm:$0xf]
    %v336 = vld [vmem:[#allocation8 + $0x1c8] sm:$0xff]
    %v337 = vld [vmem:[#allocation8 + $0x1d0] sm:$0xf]
    %v338 = vld [vmem:[#allocation8 + $0x1d4] sm:$0xff]
    %v339 = vld [vmem:[#allocation8 + $0x1dc] sm:$0xf]
    %v340 = vld [vmem:[#allocation8 + $0x1e0] sm:$0xff]
    %v341 = vld [vmem:[#allocation8 + $0x1e8] sm:$0xf]
    %v342 = vld [vmem:[#allocation8 + $0x1ec] sm:$0xff]
    %v343 = vld [vmem:[#allocation8 + $0x1f4] sm:$0xf]
    %v344 = vld [vmem:[#allocation8 + $0x1f8] sm:$0xff]
    %v345 = vld [vmem:[#allocation8 + $0x200] sm:$0xf]
    %v346 = vld [vmem:[#allocation8 + $0x204] sm:$0xff]
    %v347 = vld [vmem:[#allocation8 + $0x20c] sm:$0xf]
    %v348 = vld [vmem:[#allocation8 + $0x210] sm:$0xff]
    %v349 = vld [vmem:[#allocation8 + $0x218] sm:$0xf]
    %v350 = vld [vmem:[#allocation8 + $0x21c] sm:$0xff]
    %v351 = vld [vmem:[#allocation8 + $0x224] sm:$0xf]
    %v352 = vld [vmem:[#allocation8 + $0x228] sm:$0xff]
    %v353 = vld [vmem:[#allocation8 + $0x230] sm:$0xf]
    %v354 = vld [vmem:[#allocation8 + $0x234] sm:$0xff]
    %v355 = vld [vmem:[#allocation8 + $0x23c] sm:$0xf]
    %v356 = vld [vmem:[#allocation8 + $0x240] sm:$0xff]
    %v357 = vld [vmem:[#allocation8 + $0x248] sm:$0xf]
    %v358 = vld [vmem:[#allocation8 + $0x24c] sm:$0xff]
    %v359 = vld [vmem:[#allocation8 + $0x254] sm:$0xf]
    %v360 = vld [vmem:[#allocation8 + $0x258] sm:$0xff]
    %v361 = vld [vmem:[#allocation8 + $0x260] sm:$0xf]
    %v362 = vld [vmem:[#allocation8 + $0x264] sm:$0xff]
    %v363 = vld [vmem:[#allocation8 + $0x26c] sm:$0xf]
    %v364 = vld [vmem:[#allocation8 + $0x270] sm:$0xff]
    %v365 = vld [vmem:[#allocation8 + $0x278] sm:$0xf]
    %v366 = vld [vmem:[#allocation8 + $0x27c] sm:$0xff]
    %v367 = vld [vmem:[#allocation8 + $0x284] sm:$0xf]
    %v368 = vld [vmem:[#allocation8 + $0x288] sm:$0xff]
    %v369 = vld [vmem:[#allocation8 + $0x290] sm:$0xf]
    %v370 = vld [vmem:[#allocation8 + $0x294] sm:$0xff]
    %v371 = vld [vmem:[#allocation8 + $0x29c] sm:$0xf]
    %v372 = vld [vmem:[#allocation8 + $0x2a0] sm:$0xff]
    %v373 = vld [vmem:[#allocation8 + $0x2a8] sm:$0xf]
    %v374 = vld [vmem:[#allocation8 + $0x2ac] sm:$0xff]
    %v375 = vld [vmem:[#allocation8 + $0x2b4] sm:$0xf]
    %v376 = vld [vmem:[#allocation8 + $0x2b8] sm:$0xff]
    %v377 = vld [vmem:[#allocation8 + $0x2c0] sm:$0xf]
    %v378 = vld [vmem:[#allocation8 + $0x2c4] sm:$0xff]
    %v379 = vld [vmem:[#allocation8 + $0x2cc] sm:$0xf]
    %v380 = vld [vmem:[#allocation8 + $0x2d0] sm:$0xff]
    %v381 = vld [vmem:[#allocation8 + $0x2d8] sm:$0xf]
    %v382 = vld [vmem:[#allocation8 + $0x2dc] sm:$0xff]
    %v383 = vld [vmem:[#allocation8 + $0x2e4] sm:$0xf]
    %v384 = vld [vmem:[#allocation8 + $0x2e8] sm:$0xff]
    %v385 = vld [vmem:[#allocation8 + $0x2f0] sm:$0xf]
    %v386 = vld [vmem:[#allocation8 + $0x2f4] sm:$0xff]
    %v387 = vld [vmem:[#allocation8 + $0x2fc] sm:$0xf]
    %v388 = vld [vmem:[%s4] sm:$0x7]
    %v390 = vperm.slane %v388, 0
    %v391 = vperm.slane %v388, 1
    %v392 = vperm.slane %v388, 2
    %v524 = vunpack.c.l.b16 %v260
    %v525 = vunpack.c.h.b16 %v260
    %v526 = vunpack.c.l.b16 %v261
    %v527 = vunpack.c.l.b16 %v262
    %v528 = vunpack.c.h.b16 %v262
    %v529 = vunpack.c.l.b16 %v263
    %v530 = vunpack.c.l.b16 %v264
    %v531 = vunpack.c.h.b16 %v264
    %v532 = vunpack.c.l.b16 %v265
    %v533 = vunpack.c.l.b16 %v266
    %v534 = vunpack.c.h.b16 %v266
    %v535 = vunpack.c.l.b16 %v267
    %v536 = vunpack.c.l.b16 %v268
    %v537 = vunpack.c.h.b16 %v268
    %v538 = vunpack.c.l.b16 %v269
    %v539 = vunpack.c.l.b16 %v270
    %v540 = vunpack.c.h.b16 %v270
    %v541 = vunpack.c.l.b16 %v271
    %v542 = vunpack.c.l.b16 %v272
    %v543 = vunpack.c.h.b16 %v272
    %v544 = vunpack.c.l.b16 %v273
    %v545 = vunpack.c.l.b16 %v274
    %v546 = vunpack.c.h.b16 %v274
    %v547 = vunpack.c.l.b16 %v275
    %v548 = vunpack.c.l.b16 %v276
    %v549 = vunpack.c.h.b16 %v276
    %v550 = vunpack.c.l.b16 %v277
    %v551 = vunpack.c.l.b16 %v278
    %v552 = vunpack.c.h.b16 %v278
    %v553 = vunpack.c.l.b16 %v279
    %v554 = vunpack.c.l.b16 %v280
    %v555 = vunpack.c.h.b16 %v280
    %v556 = vunpack.c.l.b16 %v281
    %v557 = vunpack.c.l.b16 %v282
    %v558 = vunpack.c.h.b16 %v282
    %v559 = vunpack.c.l.b16 %v283
    %v560 = vunpack.c.l.b16 %v284
    %v561 = vunpack.c.h.b16 %v284
    %v562 = vunpack.c.l.b16 %v285
    %v563 = vunpack.c.l.b16 %v286
    %v564 = vunpack.c.h.b16 %v286
    %v565 = vunpack.c.l.b16 %v287
    %v566 = vunpack.c.l.b16 %v288
    %v567 = vunpack.c.h.b16 %v288
    %v568 = vunpack.c.l.b16 %v289
    %v569 = vunpack.c.l.b16 %v290
    %v570 = vunpack.c.h.b16 %v290
    %v571 = vunpack.c.l.b16 %v291
    %v572 = vunpack.c.l.b16 %v292
    %v573 = vunpack.c.h.b16 %v292
    %v574 = vunpack.c.l.b16 %v293
    %v575 = vunpack.c.l.b16 %v294
    %v576 = vunpack.c.h.b16 %v294
    %v577 = vunpack.c.l.b16 %v295
    %v578 = vunpack.c.l.b16 %v296
    %v579 = vunpack.c.h.b16 %v296
    %v580 = vunpack.c.l.b16 %v297
    %v581 = vunpack.c.l.b16 %v298
    %v582 = vunpack.c.h.b16 %v298
    %v583 = vunpack.c.l.b16 %v299
    %v584 = vunpack.c.l.b16 %v300
    %v585 = vunpack.c.h.b16 %v300
    %v586 = vunpack.c.l.b16 %v301
    %v587 = vunpack.c.l.b16 %v302
    %v588 = vunpack.c.h.b16 %v302
    %v589 = vunpack.c.l.b16 %v303
    %v590 = vunpack.c.l.b16 %v304
    %v591 = vunpack.c.h.b16 %v304
    %v592 = vunpack.c.l.b16 %v305
    %v593 = vunpack.c.l.b16 %v306
    %v594 = vunpack.c.h.b16 %v306
    %v595 = vunpack.c.l.b16 %v307
    %v596 = vunpack.c.l.b16 %v308
    %v597 = vunpack.c.h.b16 %v308
    %v598 = vunpack.c.l.b16 %v309
    %v599 = vunpack.c.l.b16 %v310
    %v600 = vunpack.c.h.b16 %v310
    %v601 = vunpack.c.l.b16 %v311
    %v602 = vunpack.c.l.b16 %v312
    %v603 = vunpack.c.h.b16 %v312
    %v604 = vunpack.c.l.b16 %v313
    %v605 = vunpack.c.l.b16 %v314
    %v606 = vunpack.c.h.b16 %v314
    %v607 = vunpack.c.l.b16 %v315
    %v608 = vunpack.c.l.b16 %v316
    %v609 = vunpack.c.h.b16 %v316
    %v610 = vunpack.c.l.b16 %v317
    %v611 = vunpack.c.l.b16 %v318
    %v612 = vunpack.c.h.b16 %v318
    %v613 = vunpack.c.l.b16 %v319
    %v614 = vunpack.c.l.b16 %v320
    %v615 = vunpack.c.h.b16 %v320
    %v616 = vunpack.c.l.b16 %v321
    %v617 = vunpack.c.l.b16 %v322
    %v618 = vunpack.c.h.b16 %v322
    %v619 = vunpack.c.l.b16 %v323
    %v620 = vunpack.c.l.b16 %v324
    %v621 = vunpack.c.h.b16 %v324
    %v622 = vunpack.c.l.b16 %v325
    %v623 = vunpack.c.l.b16 %v326
    %v624 = vunpack.c.h.b16 %v326
    %v625 = vunpack.c.l.b16 %v327
    %v626 = vunpack.c.l.b16 %v328
    %v627 = vunpack.c.h.b16 %v328
    %v628 = vunpack.c.l.b16 %v329
    %v629 = vunpack.c.l.b16 %v330
    %v630 = vunpack.c.h.b16 %v330
    %v631 = vunpack.c.l.b16 %v331
    %v632 = vunpack.c.l.b16 %v332
    %v633 = vunpack.c.h.b16 %v332
    %v634 = vunpack.c.l.b16 %v333
    %v635 = vunpack.c.l.b16 %v334
    %v636 = vunpack.c.h.b16 %v334
    %v637 = vunpack.c.l.b16 %v335
    %v638 = vunpack.c.l.b16 %v336
    %v639 = vunpack.c.h.b16 %v336
    %v640 = vunpack.c.l.b16 %v337
    %v641 = vunpack.c.l.b16 %v338
    %v642 = vunpack.c.h.b16 %v338
    %v643 = vunpack.c.l.b16 %v339
    %v644 = vunpack.c.l.b16 %v340
    %v645 = vunpack.c.h.b16 %v340
    %v646 = vunpack.c.l.b16 %v341
    %v647 = vunpack.c.l.b16 %v342
    %v648 = vunpack.c.h.b16 %v342
    %v649 = vunpack.c.l.b16 %v343
    %v650 = vunpack.c.l.b16 %v344
    %v651 = vunpack.c.h.b16 %v344
    %v652 = vunpack.c.l.b16 %v345
    %v653 = vunpack.c.l.b16 %v346
    %v654 = vunpack.c.h.b16 %v346
    %v655 = vunpack.c.l.b16 %v347
    %v656 = vunpack.c.l.b16 %v348
    %v657 = vunpack.c.h.b16 %v348
    %v658 = vunpack.c.l.b16 %v349
    %v659 = vunpack.c.l.b16 %v350
    %v660 = vunpack.c.h.b16 %v350
    %v661 = vunpack.c.l.b16 %v351
    %v662 = vunpack.c.l.b16 %v352
    %v663 = vunpack.c.h.b16 %v352
    %v664 = vunpack.c.l.b16 %v353
    %v665 = vunpack.c.l.b16 %v354
    %v666 = vunpack.c.h.b16 %v354
    %v667 = vunpack.c.l.b16 %v355
    %v668 = vunpack.c.l.b16 %v356
    %v669 = vunpack.c.h.b16 %v356
    %v670 = vunpack.c.l.b16 %v357
    %v671 = vunpack.c.l.b16 %v358
    %v672 = vunpack.c.h.b16 %v358
    %v673 = vunpack.c.l.b16 %v359
    %v674 = vunpack.c.l.b16 %v360
    %v675 = vunpack.c.h.b16 %v360
    %v676 = vunpack.c.l.b16 %v361
    %v677 = vunpack.c.l.b16 %v362
    %v678 = vunpack.c.h.b16 %v362
    %v679 = vunpack.c.l.b16 %v363
    %v680 = vunpack.c.l.b16 %v364
    %v681 = vunpack.c.h.b16 %v364
    %v682 = vunpack.c.l.b16 %v365
    %v683 = vunpack.c.l.b16 %v366
    %v684 = vunpack.c.h.b16 %v366
    %v685 = vunpack.c.l.b16 %v367
    %v686 = vunpack.c.l.b16 %v368
    %v687 = vunpack.c.h.b16 %v368
    %v688 = vunpack.c.l.b16 %v369
    %v689 = vunpack.c.l.b16 %v370
    %v690 = vunpack.c.h.b16 %v370
    %v691 = vunpack.c.l.b16 %v371
    %v692 = vunpack.c.l.b16 %v372
    %v693 = vunpack.c.h.b16 %v372
    %v694 = vunpack.c.l.b16 %v373
    %v695 = vunpack.c.l.b16 %v374
    %v696 = vunpack.c.h.b16 %v374
    %v697 = vunpack.c.l.b16 %v375
    %v698 = vunpack.c.l.b16 %v376
    %v699 = vunpack.c.h.b16 %v376
    %v700 = vunpack.c.l.b16 %v377
    %v701 = vunpack.c.l.b16 %v378
    %v702 = vunpack.c.h.b16 %v378
    %v703 = vunpack.c.l.b16 %v379
    %v704 = vunpack.c.l.b16 %v380
    %v705 = vunpack.c.h.b16 %v380
    %v706 = vunpack.c.l.b16 %v381
    %v707 = vunpack.c.l.b16 %v382
    %v708 = vunpack.c.h.b16 %v382
    %v709 = vunpack.c.l.b16 %v383
    %v710 = vunpack.c.l.b16 %v384
    %v711 = vunpack.c.h.b16 %v384
    %v712 = vunpack.c.l.b16 %v385
    %v713 = vunpack.c.l.b16 %v386
    %v714 = vunpack.c.h.b16 %v386
    %v715 = vunpack.c.l.b16 %v387
    %v716 = vpack.c.b16 %v527, %v524
    %v717 = vpack.c.b16 %v528, %v525
    %v718 = vpack.c.b16 %v529, %v526
    %v719 = vpack.c.b16 %v533, %v530
    %v720 = vpack.c.b16 %v534, %v531
    %v721 = vpack.c.b16 %v535, %v532
    %v722 = vpack.c.b16 %v539, %v536
    %v723 = vpack.c.b16 %v540, %v537
    %v724 = vpack.c.b16 %v541, %v538
    %v725 = vpack.c.b16 %v545, %v542
    %v726 = vpack.c.b16 %v546, %v543
    %v727 = vpack.c.b16 %v547, %v544
    %v728 = vpack.c.b16 %v551, %v548
    %v729 = vpack.c.b16 %v552, %v549
    %v730 = vpack.c.b16 %v553, %v550
    %v731 = vpack.c.b16 %v557, %v554
    %v732 = vpack.c.b16 %v558, %v555
    %v733 = vpack.c.b16 %v559, %v556
    %v734 = vpack.c.b16 %v563, %v560
    %v735 = vpack.c.b16 %v564, %v561
    %v736 = vpack.c.b16 %v565, %v562
    %v737 = vpack.c.b16 %v569, %v566
    %v738 = vpack.c.b16 %v570, %v567
    %v739 = vpack.c.b16 %v571, %v568
    %v740 = vpack.c.b16 %v575, %v572
    %v741 = vpack.c.b16 %v576, %v573
    %v742 = vpack.c.b16 %v577, %v574
    %v743 = vpack.c.b16 %v581, %v578
    %v744 = vpack.c.b16 %v582, %v579
    %v745 = vpack.c.b16 %v583, %v580
    %v746 = vpack.c.b16 %v587, %v584
    %v747 = vpack.c.b16 %v588, %v585
    %v748 = vpack.c.b16 %v589, %v586
    %v749 = vpack.c.b16 %v593, %v590
    %v750 = vpack.c.b16 %v594, %v591
    %v751 = vpack.c.b16 %v595, %v592
    %v752 = vpack.c.b16 %v599, %v596
    %v753 = vpack.c.b16 %v600, %v597
    %v754 = vpack.c.b16 %v601, %v598
    %v755 = vpack.c.b16 %v605, %v602
    %v756 = vpack.c.b16 %v606, %v603
    %v757 = vpack.c.b16 %v607, %v604
    %v758 = vpack.c.b16 %v611, %v608
    %v759 = vpack.c.b16 %v612, %v609
    %v760 = vpack.c.b16 %v613, %v610
    %v761 = vpack.c.b16 %v617, %v614
    %v762 = vpack.c.b16 %v618, %v615
    %v763 = vpack.c.b16 %v619, %v616
    %v764 = vpack.c.b16 %v623, %v620
    %v765 = vpack.c.b16 %v624, %v621
    %v766 = vpack.c.b16 %v625, %v622
    %v767 = vpack.c.b16 %v629, %v626
    %v768 = vpack.c.b16 %v630, %v627
    %v769 = vpack.c.b16 %v631, %v628
    %v770 = vpack.c.b16 %v635, %v632
    %v771 = vpack.c.b16 %v636, %v633
    %v772 = vpack.c.b16 %v637, %v634
    %v773 = vpack.c.b16 %v641, %v638
    %v774 = vpack.c.b16 %v642, %v639
    %v775 = vpack.c.b16 %v643, %v640
    %v776 = vpack.c.b16 %v647, %v644
    %v777 = vpack.c.b16 %v648, %v645
    %v778 = vpack.c.b16 %v649, %v646
    %v779 = vpack.c.b16 %v653, %v650
    %v780 = vpack.c.b16 %v654, %v651
    %v781 = vpack.c.b16 %v655, %v652
    %v782 = vpack.c.b16 %v659, %v656
    %v783 = vpack.c.b16 %v660, %v657
    %v784 = vpack.c.b16 %v661, %v658
    %v785 = vpack.c.b16 %v665, %v662
    %v786 = vpack.c.b16 %v666, %v663
    %v787 = vpack.c.b16 %v667, %v664
    %v788 = vpack.c.b16 %v671, %v668
    %v789 = vpack.c.b16 %v672, %v669
    %v790 = vpack.c.b16 %v673, %v670
    %v791 = vpack.c.b16 %v677, %v674
    %v792 = vpack.c.b16 %v678, %v675
    %v793 = vpack.c.b16 %v679, %v676
    %v794 = vpack.c.b16 %v683, %v680
    %v795 = vpack.c.b16 %v684, %v681
    %v796 = vpack.c.b16 %v685, %v682
    %v797 = vpack.c.b16 %v689, %v686
    %v798 = vpack.c.b16 %v690, %v687
    %v799 = vpack.c.b16 %v691, %v688
    %v800 = vpack.c.b16 %v695, %v692
    %v801 = vpack.c.b16 %v696, %v693
    %v802 = vpack.c.b16 %v697, %v694
    %v803 = vpack.c.b16 %v701, %v698
    %v804 = vpack.c.b16 %v702, %v699
    %v805 = vpack.c.b16 %v703, %v700
    %v806 = vpack.c.b16 %v707, %v704
    %v807 = vpack.c.b16 %v708, %v705
    %v808 = vpack.c.b16 %v709, %v706
    %v809 = vpack.c.b16 %v713, %v710
    %v810 = vpack.c.b16 %v714, %v711
    %v811 = vpack.c.b16 %v715, %v712
    %908 = vmatpush.bf16.msra.mxu0 %v737
    %909 = vmatpush.bf16.msra.mxu0 %v734
    %910 = vmatpush.bf16.msra.mxu0 %v731
    %911 = vmatpush.bf16.msra.mxu0 %v728
    %912 = vmatpush.bf16.msra.mxu0 %v725
    %913 = vmatpush.bf16.msra.mxu0 %v722
    %914 = vmatpush.bf16.msra.mxu0 %v719
    %915 = vmatpush.bf16.msra.mxu0 %v716
    %916 = vmatmul.bf16.gmra.mxu0 %v256
    %v917 = vpop.f32.mrf.mxu0
    %v918 = vadd.f32 %v390, %v917
    %v919 = vpop.f32.mrf.mxu0
    %v920 = vadd.f32 %v390, %v919
    %921 = vdwg.mxu0
    %922 = vmatpush.bf16.msra.mxu0 %v761
    %923 = vmatpush.bf16.msra.mxu0 %v758
    %924 = vmatpush.bf16.msra.mxu0 %v755
    %925 = vmatpush.bf16.msra.mxu0 %v752
    %926 = vmatpush.bf16.msra.mxu0 %v749
    %927 = vmatpush.bf16.msra.mxu0 %v746
    %928 = vmatpush.bf16.msra.mxu0 %v743
    %929 = vmatpush.bf16.msra.mxu0 %v740
    %930 = vmatmul.bf16.gmra.mxu0 %v257
    %v931 = vpop.f32.mrf.mxu0
    %v932 = vadd.f32 %v918, %v931
    %v933 = vpop.f32.mrf.mxu0
    %v934 = vadd.f32 %v920, %v933
    %935 = vdwg.mxu0
    %936 = vmatpush.bf16.msra.mxu0 %v785
    %937 = vmatpush.bf16.msra.mxu0 %v782
    %938 = vmatpush.bf16.msra.mxu0 %v779
    %939 = vmatpush.bf16.msra.mxu0 %v776
    %940 = vmatpush.bf16.msra.mxu0 %v773
    %941 = vmatpush.bf16.msra.mxu0 %v770
    %942 = vmatpush.bf16.msra.mxu0 %v767
    %943 = vmatpush.bf16.msra.mxu0 %v764
    %944 = vmatmul.bf16.gmra.mxu0 %v258
    %v945 = vpop.f32.mrf.mxu0
    %v946 = vadd.f32 %v932, %v945
    %v947 = vpop.f32.mrf.mxu0
    %v948 = vadd.f32 %v934, %v947
    %949 = vdwg.mxu0
    %950 = vmatpush.bf16.msra.mxu0 %v809
    %951 = vmatpush.bf16.msra.mxu0 %v806
    %952 = vmatpush.bf16.msra.mxu0 %v803
    %953 = vmatpush.bf16.msra.mxu0 %v800
    %954 = vmatpush.bf16.msra.mxu0 %v797
    %955 = vmatpush.bf16.msra.mxu0 %v794
    %956 = vmatpush.bf16.msra.mxu0 %v791
    %957 = vmatpush.bf16.msra.mxu0 %v788
    %958 = vmatmul.bf16.gmra.mxu0 %v259
    %v959 = vpop.f32.mrf.mxu0
    %v960 = vadd.f32 %v946, %v959
    %v961 = vpop.f32.mrf.mxu0
    %v962 = vadd.f32 %v948, %v961
    %963 = vdwg.mxu0
    %964 = vmatpush.bf16.msra.mxu0 %v738
    %965 = vmatpush.bf16.msra.mxu0 %v735
    %966 = vmatpush.bf16.msra.mxu0 %v732
    %967 = vmatpush.bf16.msra.mxu0 %v729
    %968 = vmatpush.bf16.msra.mxu0 %v726
    %969 = vmatpush.bf16.msra.mxu0 %v723
    %970 = vmatpush.bf16.msra.mxu0 %v720
    %971 = vmatpush.bf16.msra.mxu0 %v717
    %972 = vmatmul.bf16.gmra.mxu0 %v256
    %v973 = vpop.f32.mrf.mxu0
    %v974 = vadd.f32 %v391, %v973
    %v975 = vpop.f32.mrf.mxu0
    %v976 = vadd.f32 %v391, %v975
    %977 = vdwg.mxu0
    %978 = vmatpush.bf16.msra.mxu0 %v762
    %979 = vmatpush.bf16.msra.mxu0 %v759
    %980 = vmatpush.bf16.msra.mxu0 %v756
    %981 = vmatpush.bf16.msra.mxu0 %v753
    %982 = vmatpush.bf16.msra.mxu0 %v750
    %983 = vmatpush.bf16.msra.mxu0 %v747
    %984 = vmatpush.bf16.msra.mxu0 %v744
    %985 = vmatpush.bf16.msra.mxu0 %v741
    %986 = vmatmul.bf16.gmra.mxu0 %v257
    %v987 = vpop.f32.mrf.mxu0
    %v988 = vadd.f32 %v974, %v987
    %v989 = vpop.f32.mrf.mxu0
    %v990 = vadd.f32 %v976, %v989
    %991 = vdwg.mxu0
    %992 = vmatpush.bf16.msra.mxu0 %v786
    %993 = vmatpush.bf16.msra.mxu0 %v783
    %994 = vmatpush.bf16.msra.mxu0 %v780
    %995 = vmatpush.bf16.msra.mxu0 %v777
    %996 = vmatpush.bf16.msra.mxu0 %v774
    %997 = vmatpush.bf16.msra.mxu0 %v771
    %998 = vmatpush.bf16.msra.mxu0 %v768
    %999 = vmatpush.bf16.msra.mxu0 %v765
    %1000 = vmatmul.bf16.gmra.mxu0 %v258
    %v1001 = vpop.f32.mrf.mxu0
    %v1002 = vadd.f32 %v988, %v1001
    %v1003 = vpop.f32.mrf.mxu0
    %v1004 = vadd.f32 %v990, %v1003
    %1005 = vdwg.mxu0
    %1006 = vmatpush.bf16.msra.mxu0 %v810
    %1007 = vmatpush.bf16.msra.mxu0 %v807
    %1008 = vmatpush.bf16.msra.mxu0 %v804
    %1009 = vmatpush.bf16.msra.mxu0 %v801
    %1010 = vmatpush.bf16.msra.mxu0 %v798
    %1011 = vmatpush.bf16.msra.mxu0 %v795
    %1012 = vmatpush.bf16.msra.mxu0 %v792
    %1013 = vmatpush.bf16.msra.mxu0 %v789
    %1014 = vmatmul.bf16.gmra.mxu0 %v259
    %v1015 = vpop.f32.mrf.mxu0
    %v1016 = vadd.f32 %v1002, %v1015
    %v1017 = vpop.f32.mrf.mxu0
    %v1018 = vadd.f32 %v1004, %v1017
    %1019 = vdwg.mxu0
    %1020 = vmatpush.bf16.msra.mxu0 %v739
    %1021 = vmatpush.bf16.msra.mxu0 %v736
    %1022 = vmatpush.bf16.msra.mxu0 %v733
    %1023 = vmatpush.bf16.msra.mxu0 %v730
    %1024 = vmatpush.bf16.msra.mxu0 %v727
    %1025 = vmatpush.bf16.msra.mxu0 %v724
    %1026 = vmatpush.bf16.msra.mxu0 %v721
    %1027 = vmatpush.bf16.msra.mxu0 %v718
    %1028 = vmatmul.bf16.gmra.mxu0 %v256
    %v1029 = vpop.f32.mrf.mxu0
    %v1030 = vadd.f32 %v392, %v1029
    %v1031 = vpop.f32.mrf.mxu0
    %v1032 = vadd.f32 %v392, %v1031
    %1033 = vdwg.mxu0
    %1034 = vmatpush.bf16.msra.mxu0 %v763
    %1035 = vmatpush.bf16.msra.mxu0 %v760
    %1036 = vmatpush.bf16.msra.mxu0 %v757
    %1037 = vmatpush.bf16.msra.mxu0 %v754
    %1038 = vmatpush.bf16.msra.mxu0 %v751
    %1039 = vmatpush.bf16.msra.mxu0 %v748
    %1040 = vmatpush.bf16.msra.mxu0 %v745
    %1041 = vmatpush.bf16.msra.mxu0 %v742
    %1042 = vmatmul.bf16.gmra.mxu0 %v257
    %v1043 = vpop.f32.mrf.mxu0
    %v1044 = vadd.f32 %v1030, %v1043
    %v1045 = vpop.f32.mrf.mxu0
    %v1046 = vadd.f32 %v1032, %v1045
    %1047 = vdwg.mxu0
    %1048 = vmatpush.bf16.msra.mxu0 %v787
    %1049 = vmatpush.bf16.msra.mxu0 %v784
    %1050 = vmatpush.bf16.msra.mxu0 %v781
    %1051 = vmatpush.bf16.msra.mxu0 %v778
    %1052 = vmatpush.bf16.msra.mxu0 %v775
    %1053 = vmatpush.bf16.msra.mxu0 %v772
    %1054 = vmatpush.bf16.msra.mxu0 %v769
    %1055 = vmatpush.bf16.msra.mxu0 %v766
    %1056 = vmatmul.bf16.gmra.mxu0 %v258
    %v1057 = vpop.f32.mrf.mxu0
    %v1058 = vadd.f32 %v1044, %v1057
    %v1059 = vpop.f32.mrf.mxu0
    %v1060 = vadd.f32 %v1046, %v1059
    %1061 = vdwg.mxu0
    %1062 = vmatpush.bf16.msra.mxu0 %v811
    %1063 = vmatpush.bf16.msra.mxu0 %v808
    %1064 = vmatpush.bf16.msra.mxu0 %v805
    %1065 = vmatpush.bf16.msra.mxu0 %v802
    %1066 = vmatpush.bf16.msra.mxu0 %v799
    %1067 = vmatpush.bf16.msra.mxu0 %v796
    %1068 = vmatpush.bf16.msra.mxu0 %v793
    %1069 = vmatpush.bf16.msra.mxu0 %v790
    %1070 = vmatmul.bf16.gmra.mxu0 %v259
    %v1071 = vpop.f32.mrf.mxu0
    %v1072 = vadd.f32 %v1058, %v1071
    %v1073 = vpop.f32.mrf.mxu0
    %v1074 = vadd.f32 %v1060, %v1073
    %1075 = vdwg.mxu0
    %v1076 = vmax.f32 %v960, 0.0
    %v1077 = vmax.f32 %v1016, 0.0
    %v1078 = vmax.f32 %v1072, 0.0
    %v1079 = vmax.f32 %v962, 0.0
    %v1080 = vmax.f32 %v1018, 0.0
    %v1081 = vmax.f32 %v1074, 0.0
    %v1082 = vpack.c.bf16 %v1079, %v1076
    %v1083 = vpack.c.bf16 %v1080, %v1077
    %v1084 = vpack.c.bf16 %v1081, %v1078
    %v1085 = vld [vmem:[#allocation10] sm:$0xf]
    %v1086 = vld [vmem:[#allocation10 + $0x4] sm:$0xf]
    %v1087 = vld [vmem:[#allocation10 + $0x8] sm:$0xf]
    %v1088 = vld [vmem:[#allocation10 + $0xc] sm:$0xf]
    %v1089 = vld [vmem:[#allocation10 + $0x10] sm:$0xf]
    %v1090 = vld [vmem:[#allocation10 + $0x14] sm:$0xf]
    %v1091 = vld [vmem:[#allocation10 + $0x18] sm:$0xf]
    %v1092 = vld [vmem:[#allocation10 + $0x1c] sm:$0xf]
    %v1093 = vld [vmem:[#allocation10 + $0x20] sm:$0xf]
    %v1094 = vld [vmem:[#allocation10 + $0x24] sm:$0xf]
    %v1095 = vld [vmem:[#allocation10 + $0x28] sm:$0xf]
    %v1096 = vld [vmem:[#allocation10 + $0x2c] sm:$0xf]
    %v1097 = vld [vmem:[#allocation10 + $0x30] sm:$0xf]
    %v1098 = vld [vmem:[#allocation10 + $0x34] sm:$0xf]
    %v1099 = vld [vmem:[#allocation10 + $0x38] sm:$0xf]
    %v1100 = vld [vmem:[#allocation10 + $0x3c] sm:$0xf]
    %v1101 = vld [vmem:[#allocation10 + $0x40] sm:$0xf]
    %v1102 = vld [vmem:[#allocation10 + $0x44] sm:$0xf]
    %v1103 = vld [vmem:[#allocation10 + $0x48] sm:$0xf]
    %v1104 = vld [vmem:[#allocation10 + $0x4c] sm:$0xf]
    %v1105 = vld [vmem:[#allocation10 + $0x50] sm:$0xf]
    %v1106 = vld [vmem:[#allocation10 + $0x54] sm:$0xf]
    %v1107 = vld [vmem:[#allocation10 + $0x58] sm:$0xf]
    %v1108 = vld [vmem:[#allocation10 + $0x5c] sm:$0xf]
    %v1109 = vld [vmem:[#allocation10 + $0x60] sm:$0xf]
    %v1110 = vld [vmem:[#allocation10 + $0x64] sm:$0xf]
    %v1111 = vld [vmem:[#allocation10 + $0x68] sm:$0xf]
    %v1112 = vld [vmem:[#allocation10 + $0x6c] sm:$0xf]
    %v1113 = vld [vmem:[#allocation10 + $0x70] sm:$0xf]
    %v1114 = vld [vmem:[#allocation10 + $0x74] sm:$0xf]
    %v1115 = vld [vmem:[#allocation10 + $0x78] sm:$0xf]
    %v1116 = vld [vmem:[#allocation10 + $0x7c] sm:$0xf]
    %v1117 = vld [vmem:[#allocation10 + $0x80] sm:$0xf]
    %v1118 = vld [vmem:[#allocation10 + $0x84] sm:$0xf]
    %v1119 = vld [vmem:[#allocation10 + $0x88] sm:$0xf]
    %v1120 = vld [vmem:[#allocation10 + $0x8c] sm:$0xf]
    %v1121 = vld [vmem:[#allocation10 + $0x90] sm:$0xf]
    %v1122 = vld [vmem:[#allocation10 + $0x94] sm:$0xf]
    %v1123 = vld [vmem:[#allocation10 + $0x98] sm:$0xf]
    %v1124 = vld [vmem:[#allocation10 + $0x9c] sm:$0xf]
    %v1125 = vld [vmem:[#allocation10 + $0xa0] sm:$0xf]
    %v1126 = vld [vmem:[#allocation10 + $0xa4] sm:$0xf]
    %v1127 = vld [vmem:[#allocation10 + $0xa8] sm:$0xf]
    %v1128 = vld [vmem:[#allocation10 + $0xac] sm:$0xf]
    %v1129 = vld [vmem:[#allocation10 + $0xb0] sm:$0xf]
    %v1130 = vld [vmem:[#allocation10 + $0xb4] sm:$0xf]
    %v1131 = vld [vmem:[#allocation10 + $0xb8] sm:$0xf]
    %v1132 = vld [vmem:[#allocation10 + $0xbc] sm:$0xf]
    %v1133 = vld [vmem:[%s6] sm:$0x1]
    %v1135 = vperm.slane %v1133, 0
    %v1185 = vunpack.c.l.b16 %v1085
    %v1186 = vunpack.c.l.b16 %v1086
    %v1187 = vunpack.c.l.b16 %v1087
    %v1188 = vunpack.c.l.b16 %v1088
    %v1189 = vunpack.c.l.b16 %v1089
    %v1190 = vunpack.c.l.b16 %v1090
    %v1191 = vunpack.c.l.b16 %v1091
    %v1192 = vunpack.c.l.b16 %v1092
    %v1193 = vunpack.c.l.b16 %v1093
    %v1194 = vunpack.c.l.b16 %v1094
    %v1195 = vunpack.c.l.b16 %v1095
    %v1196 = vunpack.c.l.b16 %v1096
    %v1197 = vunpack.c.l.b16 %v1097
    %v1198 = vunpack.c.l.b16 %v1098
    %v1199 = vunpack.c.l.b16 %v1099
    %v1200 = vunpack.c.l.b16 %v1100
    %v1201 = vunpack.c.l.b16 %v1101
    %v1202 = vunpack.c.l.b16 %v1102
    %v1203 = vunpack.c.l.b16 %v1103
    %v1204 = vunpack.c.l.b16 %v1104
    %v1205 = vunpack.c.l.b16 %v1105
    %v1206 = vunpack.c.l.b16 %v1106
    %v1207 = vunpack.c.l.b16 %v1107
    %v1208 = vunpack.c.l.b16 %v1108
    %v1209 = vunpack.c.l.b16 %v1109
    %v1210 = vunpack.c.l.b16 %v1110
    %v1211 = vunpack.c.l.b16 %v1111
    %v1212 = vunpack.c.l.b16 %v1112
    %v1213 = vunpack.c.l.b16 %v1113
    %v1214 = vunpack.c.l.b16 %v1114
    %v1215 = vunpack.c.l.b16 %v1115
    %v1216 = vunpack.c.l.b16 %v1116
    %v1217 = vunpack.c.l.b16 %v1117
    %v1218 = vunpack.c.l.b16 %v1118
    %v1219 = vunpack.c.l.b16 %v1119
    %v1220 = vunpack.c.l.b16 %v1120
    %v1221 = vunpack.c.l.b16 %v1121
    %v1222 = vunpack.c.l.b16 %v1122
    %v1223 = vunpack.c.l.b16 %v1123
    %v1224 = vunpack.c.l.b16 %v1124
    %v1225 = vunpack.c.l.b16 %v1125
    %v1226 = vunpack.c.l.b16 %v1126
    %v1227 = vunpack.c.l.b16 %v1127
    %v1228 = vunpack.c.l.b16 %v1128
    %v1229 = vunpack.c.l.b16 %v1129
    %v1230 = vunpack.c.l.b16 %v1130
    %v1231 = vunpack.c.l.b16 %v1131
    %v1232 = vunpack.c.l.b16 %v1132
    %v1233 = vpack.c.b16 %v1186, %v1185
    %v1234 = vpack.c.b16 %v1188, %v1187
    %v1235 = vpack.c.b16 %v1190, %v1189
    %v1236 = vpack.c.b16 %v1192, %v1191
    %v1237 = vpack.c.b16 %v1194, %v1193
    %v1238 = vpack.c.b16 %v1196, %v1195
    %v1239 = vpack.c.b16 %v1198, %v1197
    %v1240 = vpack.c.b16 %v1200, %v1199
    %v1241 = vpack.c.b16 %v1202, %v1201
    %v1242 = vpack.c.b16 %v1204, %v1203
    %v1243 = vpack.c.b16 %v1206, %v1205
    %v1244 = vpack.c.b16 %v1208, %v1207
    %v1245 = vpack.c.b16 %v1210, %v1209
    %v1246 = vpack.c.b16 %v1212, %v1211
    %v1247 = vpack.c.b16 %v1214, %v1213
    %v1248 = vpack.c.b16 %v1216, %v1215
    %v1249 = vpack.c.b16 %v1218, %v1217
    %v1250 = vpack.c.b16 %v1220, %v1219
    %v1251 = vpack.c.b16 %v1222, %v1221
    %v1252 = vpack.c.b16 %v1224, %v1223
    %v1253 = vpack.c.b16 %v1226, %v1225
    %v1254 = vpack.c.b16 %v1228, %v1227
    %v1255 = vpack.c.b16 %v1230, %v1229
    %v1256 = vpack.c.b16 %v1232, %v1231
    %1281 = vmatpush.bf16.msra.mxu0 %v1240
    %1282 = vmatpush.bf16.msra.mxu0 %v1239
    %1283 = vmatpush.bf16.msra.mxu0 %v1238
    %1284 = vmatpush.bf16.msra.mxu0 %v1237
    %1285 = vmatpush.bf16.msra.mxu0 %v1236
    %1286 = vmatpush.bf16.msra.mxu0 %v1235
    %1287 = vmatpush.bf16.msra.mxu0 %v1234
    %1288 = vmatpush.bf16.msra.mxu0 %v1233
    %1289 = vmatmul.bf16.gmra.mxu0 %v1082
    %v1290 = vpop.f32.mrf.mxu0
    %v1291 = vadd.f32 %v1135, %v1290
    %v1292 = vpop.f32.mrf.mxu0
    %v1293 = vadd.f32 %v1135, %v1292
    %1294 = vdwg.mxu0
    %1295 = vmatpush.bf16.msra.mxu0 %v1248
    %1296 = vmatpush.bf16.msra.mxu0 %v1247
    %1297 = vmatpush.bf16.msra.mxu0 %v1246
    %1298 = vmatpush.bf16.msra.mxu0 %v1245
    %1299 = vmatpush.bf16.msra.mxu0 %v1244
    %1300 = vmatpush.bf16.msra.mxu0 %v1243
    %1301 = vmatpush.bf16.msra.mxu0 %v1242
    %1302 = vmatpush.bf16.msra.mxu0 %v1241
    %1303 = vmatmul.bf16.gmra.mxu0 %v1083
    %v1304 = vpop.f32.mrf.mxu0
    %v1305 = vadd.f32 %v1291, %v1304
    %v1306 = vpop.f32.mrf.mxu0
    %v1307 = vadd.f32 %v1293, %v1306
    %1308 = vdwg.mxu0
    %1309 = vmatpush.bf16.msra.mxu0 %v1256
    %1310 = vmatpush.bf16.msra.mxu0 %v1255
    %1311 = vmatpush.bf16.msra.mxu0 %v1254
    %1312 = vmatpush.bf16.msra.mxu0 %v1253
    %1313 = vmatpush.bf16.msra.mxu0 %v1252
    %1314 = vmatpush.bf16.msra.mxu0 %v1251
    %1315 = vmatpush.bf16.msra.mxu0 %v1250
    %1316 = vmatpush.bf16.msra.mxu0 %v1249
    %1317 = vmatmul.bf16.gmra.mxu0 %v1084
    %v1318 = vpop.f32.mrf.mxu0
    %v1319 = vadd.f32 %v1305, %v1318
    %v1320 = vpop.f32.mrf.mxu0
    %v1321 = vadd.f32 %v1307, %v1320
    %1322 = vdwg.mxu0
    %v1323 = vmax.f32 %v1319, 0.0
    %v1324 = vmax.f32 %v1321, 0.0
    %v1325 = vpack.c.bf16 %v1324, %v1323
    %v1326 = vld [vmem:[#allocation11] sm:$0xf]
    %v1327 = vld [vmem:[#allocation11 + $0x4] sm:$0xf]
    %v1328 = vld [vmem:[#allocation11 + $0x8] sm:$0xf]
    %v1329 = vld [vmem:[#allocation11 + $0xc] sm:$0xf]
    %v1330 = vld [vmem:[#allocation11 + $0x10] sm:$0xf]
    %v1331 = vld [vmem:[#allocation11 + $0x14] sm:$0xf]
    %v1332 = vld [vmem:[#allocation11 + $0x18] sm:$0xf]
    %v1333 = vld [vmem:[#allocation11 + $0x1c] sm:$0xf]
    %v1334 = vld [vmem:[#allocation11 + $0x20] sm:$0xf]
    %v1335 = vld [vmem:[#allocation11 + $0x24] sm:$0xf]
    %v1336 = vld [vmem:[#allocation11 + $0x28] sm:$0xf]
    %v1337 = vld [vmem:[#allocation11 + $0x2c] sm:$0xf]
    %v1338 = vld [vmem:[#allocation11 + $0x30] sm:$0xf]
    %v1339 = vld [vmem:[#allocation11 + $0x34] sm:$0xf]
    %v1340 = vld [vmem:[#allocation11 + $0x38] sm:$0xf]
    %v1341 = vld [vmem:[#allocation11 + $0x3c] sm:$0xf]
    %v1342 = vld [vmem:[%s8] sm:$0x1]
    %v1344 = vperm.slane %v1342, 0
    %v1362 = vunpack.c.l.b16 %v1326
    %v1363 = vunpack.c.l.b16 %v1327
    %v1364 = vunpack.c.l.b16 %v1328
    %v1365 = vunpack.c.l.b16 %v1329
    %v1366 = vunpack.c.l.b16 %v1330
    %v1367 = vunpack.c.l.b16 %v1331
    %v1368 = vunpack.c.l.b16 %v1332
    %v1369 = vunpack.c.l.b16 %v1333
    %v1370 = vunpack.c.l.b16 %v1334
    %v1371 = vunpack.c.l.b16 %v1335
    %v1372 = vunpack.c.l.b16 %v1336
    %v1373 = vunpack.c.l.b16 %v1337
    %v1374 = vunpack.c.l.b16 %v1338
    %v1375 = vunpack.c.l.b16 %v1339
    %v1376 = vunpack.c.l.b16 %v1340
    %v1377 = vunpack.c.l.b16 %v1341
    %v1378 = vpack.c.b16 %v1363, %v1362
    %v1379 = vpack.c.b16 %v1365, %v1364
    %v1380 = vpack.c.b16 %v1367, %v1366
    %v1381 = vpack.c.b16 %v1369, %v1368
    %v1382 = vpack.c.b16 %v1371, %v1370
    %v1383 = vpack.c.b16 %v1373, %v1372
    %v1384 = vpack.c.b16 %v1375, %v1374
    %v1385 = vpack.c.b16 %v1377, %v1376
    %1394 = vmatpush.bf16.msra.mxu0 %v1385
    %1395 = vmatpush.bf16.msra.mxu0 %v1384
    %1396 = vmatpush.bf16.msra.mxu0 %v1383
    %1397 = vmatpush.bf16.msra.mxu0 %v1382
    %1398 = vmatpush.bf16.msra.mxu0 %v1381
    %1399 = vmatpush.bf16.msra.mxu0 %v1380
    %1400 = vmatpush.bf16.msra.mxu0 %v1379
    %1401 = vmatpush.bf16.msra.mxu0 %v1378
    %1402 = vmatmul.bf16.gmra.mxu0 %v1325
    %v1403 = vpop.f32.mrf.mxu0
    %v1404 = vadd.f32 %v1344, %v1403
    %v1405 = vpop.f32.mrf.mxu0
    %v1406 = vadd.f32 %v1344, %v1405
    %1407 = vdwg.mxu0
    %v1408 = vmax.f32 %v1404, 0.0
    %v1409 = vmax.f32 %v1406, 0.0
    %v1410 = vpack.c.bf16 %v1409, %v1408
    %v1411 = vld [vmem:[#allocation13] sm:$0xf]
    %v1412 = vld [vmem:[#allocation13 + $0x4] sm:$0xf]
    %v1413 = vld [vmem:[#allocation13 + $0x8] sm:$0xf]
    %v1414 = vld [vmem:[#allocation13 + $0xc] sm:$0xf]
    %v1415 = vld [vmem:[#allocation13 + $0x10] sm:$0xf]
    %v1416 = vld [vmem:[#allocation13 + $0x14] sm:$0xf]
    %v1417 = vld [vmem:[#allocation13 + $0x18] sm:$0xf]
    %v1418 = vld [vmem:[#allocation13 + $0x1c] sm:$0xf]
    %v1419 = vld [vmem:[#allocation13 + $0x20] sm:$0xf]
    %v1420 = vld [vmem:[#allocation13 + $0x24] sm:$0xf]
    %v1421 = vld [vmem:[#allocation13 + $0x28] sm:$0xf]
    %v1422 = vld [vmem:[#allocation13 + $0x2c] sm:$0xf]
    %v1423 = vld [vmem:[#allocation13 + $0x30] sm:$0xf]
    %v1424 = vld [vmem:[#allocation13 + $0x34] sm:$0xf]
    %v1425 = vld [vmem:[#allocation13 + $0x38] sm:$0xf]
    %v1426 = vld [vmem:[#allocation13 + $0x3c] sm:$0xf]
    %v1427 = vld [vmem:[%s10] sm:$0x1]
    %v1429 = vperm.slane %v1427, 0
    %v1447 = vunpack.c.l.b16 %v1411
    %v1448 = vunpack.c.l.b16 %v1412
    %v1449 = vunpack.c.l.b16 %v1413
    %v1450 = vunpack.c.l.b16 %v1414
    %v1451 = vunpack.c.l.b16 %v1415
    %v1452 = vunpack.c.l.b16 %v1416
    %v1453 = vunpack.c.l.b16 %v1417
    %v1454 = vunpack.c.l.b16 %v1418
    %v1455 = vunpack.c.l.b16 %v1419
    %v1456 = vunpack.c.l.b16 %v1420
    %v1457 = vunpack.c.l.b16 %v1421
    %v1458 = vunpack.c.l.b16 %v1422
    %v1459 = vunpack.c.l.b16 %v1423
    %v1460 = vunpack.c.l.b16 %v1424
    %v1461 = vunpack.c.l.b16 %v1425
    %v1462 = vunpack.c.l.b16 %v1426
    %v1463 = vpack.c.b16 %v1448, %v1447
    %v1464 = vpack.c.b16 %v1450, %v1449
    %v1465 = vpack.c.b16 %v1452, %v1451
    %v1466 = vpack.c.b16 %v1454, %v1453
    %v1467 = vpack.c.b16 %v1456, %v1455
    %v1468 = vpack.c.b16 %v1458, %v1457
    %v1469 = vpack.c.b16 %v1460, %v1459
    %v1470 = vpack.c.b16 %v1462, %v1461
    %1479 = vmatpush.bf16.msra.mxu0 %v1470
    %1480 = vmatpush.bf16.msra.mxu0 %v1469
    %1481 = vmatpush.bf16.msra.mxu0 %v1468
    %1482 = vmatpush.bf16.msra.mxu0 %v1467
    %1483 = vmatpush.bf16.msra.mxu0 %v1466
    %1484 = vmatpush.bf16.msra.mxu0 %v1465
    %1485 = vmatpush.bf16.msra.mxu0 %v1464
    %1486 = vmatpush.bf16.msra.mxu0 %v1463
    %1487 = vmatmul.bf16.gmra.mxu0 %v1410
    %v1488 = vpop.f32.mrf.mxu0
    %v1489 = vadd.f32 %v1429, %v1488
    %v1490 = vpop.f32.mrf.mxu0
    %v1491 = vadd.f32 %v1429, %v1490
    %1492 = vdwg.mxu0
    %v1493 = vpack.c.bf16 %v1489, %v1489
    %v1494 = vpack.c.bf16 %v1491, %v1491
    %1495 = vst [vmem:[#allocation14] sm:$0xf] %v1493
    %1496 = vst [vmem:[#allocation14 + $0x4] sm:$0xf] %v1494
    // Predicated region
    $region74: #{tpu_custom_call.1} parent=1 // pred_check
      _
    $region75: #{tpu_custom_call.1} parent=1 // pred_check_branch
      %1498 = sbr.rel (0) target = $region77
    $region76: #{tpu_custom_call.1} parent=1 // pred_region
      %1500 = vsyncadd [#allocation4], 0
      %s1501 = sshll.u32 [#allocation14], 4
      %s1502 = int_to_ptr.vmem [resolvable:$true] %s1501
      %s1503 = sshll.u32 %s11, 4
      %s1504 = int_to_ptr.hbm [resolvable:$true] %s1503
      %1509 = dma.vmem_to_hbm [thread:$0]  %s1502, 128, %s1504, [#allocation4], 64, 64, 4
    $region77: #{tpu_custom_call.1} parent=1 // pred_fallthru
      _
    // Predicated region
    $region78: #{tpu_custom_call.1} parent=1 // pred_check
      _
    $region79: #{tpu_custom_call.1} parent=1 // pred_check_branch
      %1511 = sbr.rel (0) target = $region81
    $region80: #{tpu_custom_call.1} parent=1 // pred_region
      %1513 = dma.done [#allocation4], 128
    $region81: #{tpu_custom_call.1} parent=1 // pred_fallthru
      _
    %1514 = vsyncpa [#allocation3], 1
    %1515 = vsyncpa [#allocation6], 1
    %1516 = vsyncpa [#allocation9], 1
    %1517 = vsyncpa [#allocation12], 1
    %1518 = vsyncpa [#allocation4], 1

</llo_original>
